<compile_context>
chip_gen: v7x
topology: tpu7x:2x2x1
jax: 0.10.0
libtpu: 0.0.40
codegen_flags: <defaults>
</compile_context>

<pallas_src>
import math
import functools

import jax
import jax.numpy as jnp
from jax.experimental import pallas as pl
from jax.experimental.pallas import tpu as pltpu


_NEG_INF = -1e30     # finite additive mask bias (avoids -inf -> NaN hazard)
_LN_EPS = 1e-5


def _tpu_budget():
    """(vmem_limit_bytes, row_tile_target), generation-aware with a safe fallback."""
    cap = 0
    try:
        cap = int(getattr(pltpu.get_tpu_info(), "vmem_capacity_bytes", 0) or 0)
    except Exception:
        cap = 0
    if cap >= 100 * 1024 * 1024:        # v5e / v6e: 128 MiB physical VMEM
        return 96 * 1024 * 1024, 1024
    if cap > 0:                          # v7x: 64 MiB physical VMEM
        return 44 * 1024 * 1024, 512
    return 48 * 1024 * 1024, 512         # unknown backend: conservative


_VMEM_LIMIT_BYTES, _ROW_TILE_TARGET = _tpu_budget()


def _cparams(semantics):
    return pltpu.CompilerParams(dimension_semantics=semantics,
                                vmem_limit_bytes=_VMEM_LIMIT_BYTES)


def _row_tile_and_pad(n, target=None):
    """Pick a row tile (multiple of 8) and the padded row count it evenly divides."""
    target = _ROW_TILE_TARGET if target is None else target
    if n <= target:
        t = ((n + 7) // 8) * 8
        return t, t
    t = target
    return t, ((n + t - 1) // t) * t


def _hidden_tile(hid, target=2048):
    """Hidden-dim tile for the fused MLP: full if small, else a 128-multiple divisor."""
    if hid <= target:
        return hid
    for t in range(target - target % 128, 127, -128):
        if hid % t == 0:
            return t
    return hid


# ---------------------------- Pallas kernels ----------------------------

def _attn_block_kernel(q_in_ref, k_in_ref, v_in_ref, bias_ref, res_ref,
                       wq_ref, bq_ref, wk_ref, bk_ref, wv_ref, bv_ref,
                       wo_ref, bo_ref, g_ref, be_ref,
                       o_ref, ctx_ref, *, heads, dh, eps):
    """One (batch, q-tile) step of: QKV proj -> MHA -> out-proj -> +residual -> LN.

    q_in:(tq,Dq)  k_in,v_in:(Tk,Dk)  bias:(1,Tk) additive key-padding mask
    res:(tq,Dq);  weights are bf16 and VMEM-resident, biases/gamma/beta f32 (1,X);
    ctx_ref is a (tq,E) f32 VMEM scratch holding the per-head attention outputs.
    The softmax scale is pre-folded into wq/bq at parameter-prep time.
    """
    f32, bf16 = jnp.float32, jnp.bfloat16
    q = (jnp.dot(q_in_ref[...].astype(bf16), wq_ref[...],
                 preferred_element_type=f32) + bq_ref[...]).astype(bf16)
    k = (jnp.dot(k_in_ref[...].astype(bf16), wk_ref[...],
                 preferred_element_type=f32) + bk_ref[...]).astype(bf16)
    v = (jnp.dot(v_in_ref[...].astype(bf16), wv_ref[...],
                 preferred_element_type=f32) + bv_ref[...]).astype(bf16)
    bias = bias_ref[...]                                     # (1, Tk) f32

    for h in range(heads):                                   # static unroll over heads
        sl = slice(h * dh, (h + 1) * dh)
        s = jax.lax.dot_general(q[:, sl], k[:, sl], (((1,), (1,)), ((), ())),
                                preferred_element_type=f32)  # (tq, Tk)
        s = s + bias
        m = jnp.max(s, axis=-1, keepdims=True)
        p = jnp.exp(s - m)
        inv = pl.reciprocal(jnp.sum(p, axis=-1, keepdims=True), approx=True)
        # direct per-head store into VMEM scratch: no concat epilogue, vregs freed
        ctx_ref[:, sl] = jnp.dot((p * inv).astype(bf16), v[:, sl],
                                 preferred_element_type=f32)

    y = (jnp.dot(ctx_ref[...].astype(bf16), wo_ref[...], preferred_element_type=f32)
         + bo_ref[...] + res_ref[...].astype(f32))
    mean = jnp.mean(y, axis=-1, keepdims=True)
    var = jnp.mean((y - mean) ** 2, axis=-1, keepdims=True)
    o_ref[...] = ((y - mean) * jax.lax.rsqrt(var + eps) * g_ref[...]
                  + be_ref[...]).astype(o_ref.dtype)


def _mlp_block_kernel(x_ref, w1_ref, b1_ref, w2_ref, b2_ref, g_ref, be_ref,
                      o_ref, acc_ref, *, eps):
    """LayerNorm(x + fc2(gelu(fc1(x)))) tiled over the hidden dim (grid axis 1)."""
    j = pl.program_id(1)

    @pl.when(j == 0)
    def _init():
        acc_ref[...] = jnp.zeros_like(acc_ref)

    x = x_ref[...]
    h = (jnp.dot(x.astype(jnp.bfloat16), w1_ref[...],
                 preferred_element_type=jnp.float32) + b1_ref[...])
    h = 0.5 * h * (1.0 + jax.lax.erf(h * (1.0 / math.sqrt(2.0))))   # exact GELU
    acc_ref[...] += jnp.dot(h.astype(jnp.bfloat16), w2_ref[...],
                            preferred_element_type=jnp.float32)

    @pl.when(j == pl.num_programs(1) - 1)
    def _finalize():
        y = acc_ref[...] + b2_ref[...] + x.astype(jnp.float32)
        mean = jnp.mean(y, axis=-1, keepdims=True)
        var = jnp.mean((y - mean) ** 2, axis=-1, keepdims=True)
        o_ref[...] = ((y - mean) * jax.lax.rsqrt(var + eps) * g_ref[...]
                      + be_ref[...]).astype(o_ref.dtype)


# ---------------------------- Pallas wrappers ----------------------------

def fused_attn_block(p, q_in, k_in, v_in, bias, residual, ln_g, ln_b, heads):
    """QKV proj + MHA + out-proj + residual + LayerNorm in a single pallas_call."""
    b, tq, dq = q_in.shape
    tk, dk = k_in.shape[1], k_in.shape[2]
    e = p["wq"].shape[1]
    dh = e // heads

    q_tile, tq_pad = _row_tile_and_pad(tq)
    if tq_pad != tq:
        q_in = jnp.pad(q_in, ((0, 0), (0, tq_pad - tq), (0, 0)))
        residual = jnp.pad(residual, ((0, 0), (0, tq_pad - tq), (0, 0)))
    nq = tq_pad // q_tile

    const2 = lambda i, j: (0, 0)
    out = pl.pallas_call(
        functools.partial(_attn_block_kernel, heads=heads, dh=dh, eps=_LN_EPS),
        out_shape=jax.ShapeDtypeStruct((b, tq_pad, dq), q_in.dtype),
        grid=(b, nq),
        in_specs=[
            pl.BlockSpec((None, q_tile, dq), lambda i, j: (i, j, 0)),   # q input tile
            pl.BlockSpec((None, tk, dk), lambda i, j: (i, 0, 0)),       # k input
            pl.BlockSpec((None, tk, dk), lambda i, j: (i, 0, 0)),       # v input
            pl.BlockSpec((None, 1, tk), lambda i, j: (i, 0, 0)),        # key-pad bias
            pl.BlockSpec((None, q_tile, dq), lambda i, j: (i, j, 0)),   # residual tile
            pl.BlockSpec((dq, e), const2),   # wq (bf16, scale folded)
            pl.BlockSpec((1, e), const2),    # bq
            pl.BlockSpec((dk, e), const2),   # wk
            pl.BlockSpec((1, e), const2),    # bk
            pl.BlockSpec((dk, e), const2),   # wv
            pl.BlockSpec((1, e), const2),    # bv
            pl.BlockSpec((e, dq), const2),   # wo
            pl.BlockSpec((1, dq), const2),   # bo
            pl.BlockSpec((1, dq), const2),   # LN gamma
            pl.BlockSpec((1, dq), const2),   # LN beta
        ],
        out_specs=pl.BlockSpec((None, q_tile, dq), lambda i, j: (i, j, 0)),
        scratch_shapes=[pltpu.VMEM((q_tile, e), jnp.float32)],
        compiler_params=_cparams(("parallel", "parallel")),
    )(q_in, k_in, v_in, bias, residual,
      p["wq"], p["bq"], p["wk"], p["bk"], p["wv"], p["bv"],
      p["wo"], p["bo"], ln_g, ln_b)
    return out[:, :tq] if tq_pad != tq else out


def fused_mlp_block(x, w1, b1, w2, b2, ln_g, ln_b):
    """LayerNorm(x + MLP(x)) row-tiled with an 'arbitrary' hidden-dim reduction axis."""
    b, t, d = x.shape
    n = b * t
    hid = w1.shape[1]
    x2 = x.reshape(n, d)
    rt, n_pad = _row_tile_and_pad(n)
    if n_pad != n:
        x2 = jnp.pad(x2, ((0, n_pad - n), (0, 0)))
    ht = _hidden_tile(hid)

    const2 = lambda i, j: (0, 0)
    out = pl.pallas_call(
        functools.partial(_mlp_block_kernel, eps=_LN_EPS),
        out_shape=jax.ShapeDtypeStruct((n_pad, d), x.dtype),
        grid=(n_pad // rt, hid // ht),
        in_specs=[
            pl.BlockSpec((rt, d), lambda i, j: (i, 0)),    # x (resident across j)
            pl.BlockSpec((d, ht), lambda i, j: (0, j)),    # w1 hidden chunk
            pl.BlockSpec((1, ht), lambda i, j: (0, j)),    # b1 hidden chunk
            pl.BlockSpec((ht, d), lambda i, j: (j, 0)),    # w2 hidden chunk
            pl.BlockSpec((1, d), const2),                  # b2
            pl.BlockSpec((1, d), const2),                  # LN gamma
            pl.BlockSpec((1, d), const2),                  # LN beta
        ],
        out_specs=pl.BlockSpec((rt, d), lambda i, j: (i, 0)),
        scratch_shapes=[pltpu.VMEM((rt, d), jnp.float32)],
        compiler_params=_cparams(("parallel", "arbitrary")),
    )(x2, w1, b1, w2, b2, ln_g, ln_b)
    if n_pad != n:
        out = out[:n]
    return out.reshape(b, t, d)


# ---------------------------- VLBiAttnLayer forward ----------------------------

def vl_bi_attn_layer(kp, vis, lang, prompts, lang_mask, spatial_shapes,
                     vis_pos=None, vis_padding_mask=None, heads=4, n_levels=1):
    """Forward (dropout=0, with_gamma=False, with_post_norm=True). kp = prepare_params(...)."""
    # TODO(synk): per-level softmax split/concat for n_levels > 1; with a single level
    # the level-weight softmax is identically 1 and is skipped.
    assert n_levels == 1
    assert sum(h * w for h, w in spatial_shapes) == vis.shape[1]

    b, s, _ = lang.shape
    lv = vis.shape[1]

    if prompts is not None:
        prompted_lang = jnp.concatenate([lang, prompts], axis=1)
        prompted_mask = jnp.concatenate(
            [lang_mask, jnp.ones((b, prompts.shape[1]), lang_mask.dtype)], axis=1)
    else:
        prompted_lang, prompted_mask = lang, lang_mask
    tq = prompted_lang.shape[1]

    if vis_padding_mask is None:
        vis_padding_mask = jnp.zeros((b, lv), vis.dtype)

    # Additive key-padding biases, precomputed once and reused by the attentions.
    lang_bias = jnp.where(prompted_mask == 0, _NEG_INF, 0.0
                          ).astype(jnp.float32).reshape(b, 1, tq)
    vis_bias = jnp.where(vis_padding_mask != 0, _NEG_INF, 0.0
                         ).astype(jnp.float32).reshape(b, 1, lv)

    vis_pe = vis + vis_pos if vis_pos is not None else vis

    # 1) p2l self-attention on prompted language + l_norm2  (one fused kernel)
    prompted_lang = fused_attn_block(kp["p2l"], prompted_lang, prompted_lang,
                                     prompted_lang, lang_bias, prompted_lang,
                                     kp["l_norm2_g"], kp["l_norm2_b"], heads)
    # 2) l2v multi-scale cross attention (language -> vision) + l_norm1
    prompted_lang = fused_attn_block(kp["l2v"], prompted_lang, vis_pe, vis,
                                     vis_bias, prompted_lang,
                                     kp["l_norm1_g"], kp["l_norm1_b"], heads)
    # 3) prompt MLP + l_norm3
    prompted_lang = fused_mlp_block(prompted_lang,
                                    kp["pmlp_w1"], kp["pmlp_b1"],
                                    kp["pmlp_w2"], kp["pmlp_b2"],
                                    kp["l_norm3_g"], kp["l_norm3_b"])
    # 4) v2l cross attention (vision -> prompted language) + v_norm1 (residual = vis)
    vis = fused_attn_block(kp["v2l"], vis_pe, prompted_lang, prompted_lang,
                           lang_bias, vis,
                           kp["v_norm1_g"], kp["v_norm1_b"], heads)
    # 5) vision MLP + v_norm2 (with_post_norm=True)
    vis = fused_mlp_block(vis, kp["vmlp_w1"], kp["vmlp_b1"],
                          kp["vmlp_w2"], kp["vmlp_b2"],
                          kp["v_norm2_g"], kp["v_norm2_b"])

    if prompts is not None:
        return vis, prompted_lang[:, :s], prompted_lang[:, s:]
    return vis, prompted_lang, None


# ---------------------------- parameters ----------------------------

def init_params(key, v_dim, l_dim, inner_dim, heads, n_levels, mlp_ratio):
    keys = iter(jax.random.split(key, 32))

    def tn(shape):
        return (0.02 * jax.random.truncated_normal(next(keys), -2.0, 2.0, shape)
                ).astype(jnp.float32)

    def attn_params(q_dim, k_dim, with_levels=False):
        p = {"wq": tn((q_dim, inner_dim)), "bq": jnp.zeros((inner_dim,), jnp.float32),
             "wk": tn((k_dim, inner_dim)), "bk": jnp.zeros((inner_dim,), jnp.float32),
             "wv": tn((k_dim, inner_dim)), "bv": jnp.zeros((inner_dim,), jnp.float32),
             "wo": tn((inner_dim, q_dim)), "bo": jnp.zeros((q_dim,), jnp.float32)}
        if with_levels:
            # Unused for n_levels == 1 (softmax of a single logit == 1); kept for parity.
            p["wl"] = tn((q_dim, heads * n_levels))
            p["bl"] = jnp.zeros((heads * n_levels,), jnp.float32)
        return p

    hid_l, hid_v = int(l_dim * mlp_ratio), int(v_dim * mlp_ratio)
    params = {
        "p2l": attn_params(l_dim, l_dim),
        "l2v": attn_params(l_dim, v_dim, with_levels=True),
        "v2l": attn_params(v_dim, l_dim),
        "pmlp_w1": tn((l_dim, hid_l)), "pmlp_b1": jnp.zeros((hid_l,), jnp.float32),
        "pmlp_w2": tn((hid_l, l_dim)), "pmlp_b2": jnp.zeros((l_dim,), jnp.float32),
        "vmlp_w1": tn((v_dim, hid_v)), "vmlp_b1": jnp.zeros((hid_v,), jnp.float32),
        "vmlp_w2": tn((hid_v, v_dim)), "vmlp_b2": jnp.zeros((v_dim,), jnp.float32),
    }
    for n in ["l_norm1", "l_norm2", "l_norm3"]:
        params[n + "_g"] = jnp.ones((l_dim,), jnp.float32)
        params[n + "_b"] = jnp.zeros((l_dim,), jnp.float32)
    for n in ["v_norm1", "v_norm2"]:
        params[n + "_g"] = jnp.ones((v_dim,), jnp.float32)
        params[n + "_b"] = jnp.zeros((v_dim,), jnp.float32)
    return params


def prepare_params(params, inner_dim, heads):
    """One-time conversion to kernel-ready form: bf16 MXU weights, softmax scale
    folded into wq/bq, f32 biases / gamma / beta reshaped to (1, D)."""
    scale = (inner_dim // heads) ** (-0.5)
    bf16 = jnp.bfloat16

    def prep_attn(p):
        return {"wq": (p["wq"] * scale).astype(bf16), "bq": (p["bq"] * scale).reshape(1, -1),
                "wk": p["wk"].astype(bf16), "bk": p["bk"].reshape(1, -1),
                "wv": p["wv"].astype(bf16), "bv": p["bv"].reshape(1, -1),
                "wo": p["wo"].astype(bf16), "bo": p["bo"].reshape(1, -1)}

    kp = {"p2l": prep_attn(params["p2l"]),
          "l2v": prep_attn(params["l2v"]),
          "v2l": prep_attn(params["v2l"])}
    for m in ["pmlp", "vmlp"]:
        kp[m + "_w1"] = params[m + "_w1"].astype(bf16)
        kp[m + "_b1"] = params[m + "_b1"].reshape(1, -1)
        kp[m + "_w2"] = params[m + "_w2"].astype(bf16)
        kp[m + "_b2"] = params[m + "_b2"].reshape(1, -1)
    for n in ["l_norm1", "l_norm2", "l_norm3", "v_norm1", "v_norm2"]:
        kp[n + "_g"] = params[n + "_g"].reshape(1, -1)
        kp[n + "_b"] = params[n + "_b"].reshape(1, -1)
    return kp


# ---------------------------- pure-JAX reference (validation) ----------------------------

def _ref_layer(kp, vis, lang, prompts, lang_mask, vis_pos, heads):
    f32 = jnp.float32

    def ln(x, g, b, eps=_LN_EPS):
        m = jnp.mean(x, -1, keepdims=True)
        v = jnp.mean((x - m) ** 2, -1, keepdims=True)
        return (x - m) * jax.lax.rsqrt(v + eps) * g + b

    def mha(p, q_in, k_in, v_in, bias):
        q = q_in @ p["wq"].astype(f32) + p["bq"]
        k = k_in @ p["wk"].astype(f32) + p["bk"]
        v = v_in @ p["wv"].astype(f32) + p["bv"]
        b_, tq, e = q.shape
        tk = k.shape[1]
        dh = e // heads
        q = q.reshape(b_, tq, heads, dh).transpose(0, 2, 1, 3)
        k = k.reshape(b_, tk, heads, dh).transpose(0, 2, 1, 3)
        v = v.reshape(b_, tk, heads, dh).transpose(0, 2, 1, 3)
        s = jnp.einsum("bhqd,bhkd->bhqk", q, k) + bias[:, None]
        p_attn = jax.nn.softmax(s, axis=-1)
        ctx = jnp.einsum("bhqk,bhkd->bhqd", p_attn, v)
        ctx = ctx.transpose(0, 2, 1, 3).reshape(b_, tq, e)
        return ctx @ p["wo"].astype(f32) + p["bo"]

    def mlp(x, w1, b1, w2, b2):
        h = x @ w1.astype(f32) + b1
        h = 0.5 * h * (1.0 + jax.lax.erf(h / math.sqrt(2.0)))
        return h @ w2.astype(f32) + b2

    b, s, _ = lang.shape
    lv = vis.shape[1]
    plang = jnp.concatenate([lang, prompts], axis=1) if prompts is not None else lang
    pmask = (jnp.concatenate([lang_mask, jnp.ones((b, prompts.shape[1]), lang_mask.dtype)],
                             axis=1) if prompts is not None else lang_mask)
    lang_bias = jnp.where(pmask == 0, _NEG_INF, 0.0).astype(f32).reshape(b, 1, -1)
    vis_bias = jnp.zeros((b, 1, lv), f32)
    vis_pe = vis + vis_pos if vis_pos is not None else vis

    plang = ln(plang + mha(kp["p2l"], plang, plang, plang, lang_bias),
               kp["l_norm2_g"], kp["l_norm2_b"])
    plang = ln(plang + mha(kp["l2v"], plang, vis_pe, vis, vis_bias),
               kp["l_norm1_g"], kp["l_norm1_b"])
    plang = ln(plang + mlp(plang, kp["pmlp_w1"], kp["pmlp_b1"], kp["pmlp_w2"], kp["pmlp_b2"]),
               kp["l_norm3_g"], kp["l_norm3_b"])
    vis = ln(vis + mha(kp["v2l"], vis_pe, plang, plang, lang_bias),
             kp["v_norm1_g"], kp["v_norm1_b"])
    vis = ln(vis + mlp(vis, kp["vmlp_w1"], kp["vmlp_b1"], kp["vmlp_w2"], kp["vmlp_b2"]),
             kp["v_norm2_g"], kp["v_norm2_b"])
    if prompts is not None:
        return vis, plang[:, :s], plang[:, s:]
    return vis, plang, None


if __name__ == "__main__":
    B = 2
    H_sp, W_sp = 4, 4
    L_vis = H_sp * W_sp               # 16 vision tokens
    S, P = 6, 2                       # text length, prompt length
    v_dim = l_dim = 32
    inner_dim, heads, n_levels, mlp_ratio = 64, 4, 1, 2

    root = jax.random.PRNGKey(0)
    k_par, k_vis, k_lang, k_pr, k_pos = jax.random.split(root, 5)
    params = init_params(k_par, v_dim, l_dim, inner_dim, heads, n_levels, mlp_ratio)
    kparams = prepare_params(params, inner_dim, heads)

    vis = jax.random.normal(k_vis, (B, L_vis, v_dim), jnp.float32)
    lang = jax.random.normal(k_lang, (B, S, l_dim), jnp.float32)
    prompts = jax.random.normal(k_pr, (B, P, l_dim), jnp.float32)
    vis_pos = jax.random.normal(k_pos, (B, L_vis, v_dim), jnp.float32)
    lang_mask = jnp.array([[1, 1, 1, 1, 0, 0],
                           [1, 1, 1, 1, 1, 1]], jnp.float32)
    spatial_shapes = [(H_sp, W_sp)]

    vis_out, lang_out, prompts_out = vl_bi_attn_layer(
        kparams, vis, lang, prompts, lang_mask, spatial_shapes,
        vis_pos=vis_pos, heads=heads, n_levels=n_levels)
    jax.block_until_ready((vis_out, lang_out, prompts_out))

    assert vis_out.shape == (B, L_vis, v_dim)
    assert lang_out.shape == (B, S, l_dim)
    assert prompts_out.shape == (B, P, l_dim)
    assert bool(jnp.all(jnp.isfinite(vis_out))) and bool(jnp.all(jnp.isfinite(lang_out)))

    # Pure-JAX reference (same bf16-rounded weights, exact softmax) for validation.
    ref_vis, ref_lang, ref_prompts = _ref_layer(
        kparams, vis, lang, prompts, lang_mask, vis_pos, heads)
    for got, ref in ((vis_out, ref_vis), (lang_out, ref_lang), (prompts_out, ref_prompts)):
        err = float(jnp.max(jnp.abs(got - ref)))
        assert err < 0.1, f"mismatch vs reference: max abs err {err}"

    print("KERNEL_OK")
</pallas_src>

<mosaic_0001>
module attributes {stable_mosaic.version = 11 : i64} {
  func.func @_attn_block_kernel(%arg0: i32, %arg1: i32, %arg2: memref<1x8x32xf32, #tpu.memory_space<vmem>>, %arg3: memref<1x8x32xf32, #tpu.memory_space<vmem>>, %arg4: memref<1x8x32xf32, #tpu.memory_space<vmem>>, %arg5: memref<1x1x8xf32, #tpu.memory_space<vmem>>, %arg6: memref<1x8x32xf32, #tpu.memory_space<vmem>>, %arg7: memref<32x64xbf16, #tpu.memory_space<vmem>>, %arg8: memref<1x64xf32, #tpu.memory_space<vmem>>, %arg9: memref<32x64xbf16, #tpu.memory_space<vmem>>, %arg10: memref<1x64xf32, #tpu.memory_space<vmem>>, %arg11: memref<32x64xbf16, #tpu.memory_space<vmem>>, %arg12: memref<1x64xf32, #tpu.memory_space<vmem>>, %arg13: memref<64x32xbf16, #tpu.memory_space<vmem>>, %arg14: memref<1x32xf32, #tpu.memory_space<vmem>>, %arg15: memref<1x32xf32, #tpu.memory_space<vmem>>, %arg16: memref<1x32xf32, #tpu.memory_space<vmem>>, %arg17: memref<1x8x32xf32, #tpu.memory_space<vmem>>, %arg18: memref<8x64xf32, #tpu.memory_space<vmem>>) attributes {dimension_semantics = [#tpu.dimension_semantics<parallel>, #tpu.dimension_semantics<parallel>], iteration_bounds = array<i64: 2, 1>, scalar_prefetch = 0 : i64, scratch_operands = 1 : i64, tpu.core_type = #tpu.core_type<tc>, window_params = [{transform_indices = @transform_0, window_bounds = array<i64: 1, 8, 32>}, {transform_indices = @transform_1, window_bounds = array<i64: 1, 8, 32>}, {transform_indices = @transform_2, window_bounds = array<i64: 1, 8, 32>}, {transform_indices = @transform_3, window_bounds = array<i64: 1, 1, 8>}, {transform_indices = @transform_4, window_bounds = array<i64: 1, 8, 32>}, {pipeline_mode = #tpu.pipeline_mode<synchronous>, transform_indices = @transform_5, window_bounds = array<i64: 32, 64>}, {pipeline_mode = #tpu.pipeline_mode<synchronous>, transform_indices = @transform_6, window_bounds = array<i64: 1, 64>}, {pipeline_mode = #tpu.pipeline_mode<synchronous>, transform_indices = @transform_7, window_bounds = array<i64: 32, 64>}, {pipeline_mode = #tpu.pipeline_mode<synchronous>, transform_indices = @transform_8, window_bounds = array<i64: 1, 64>}, {pipeline_mode = #tpu.pipeline_mode<synchronous>, transform_indices = @transform_9, window_bounds = array<i64: 32, 64>}, {pipeline_mode = #tpu.pipeline_mode<synchronous>, transform_indices = @transform_10, window_bounds = array<i64: 1, 64>}, {pipeline_mode = #tpu.pipeline_mode<synchronous>, transform_indices = @transform_11, window_bounds = array<i64: 64, 32>}, {pipeline_mode = #tpu.pipeline_mode<synchronous>, transform_indices = @transform_12, window_bounds = array<i64: 1, 32>}, {pipeline_mode = #tpu.pipeline_mode<synchronous>, transform_indices = @transform_13, window_bounds = array<i64: 1, 32>}, {pipeline_mode = #tpu.pipeline_mode<synchronous>, transform_indices = @transform_14, window_bounds = array<i64: 1, 32>}, {transform_indices = @transform_15, window_bounds = array<i64: 1, 8, 32>}]} {
    %c0 = arith.constant 0 : index
    %c0_0 = arith.constant 0 : index
    %c0_1 = arith.constant 0 : index
    %0 = vector.load %arg2[%c0, %c0_0, %c0_1] : memref<1x8x32xf32, #tpu.memory_space<vmem>>, vector<1x8x32xf32>
    %1 = vector.shape_cast %0 : vector<1x8x32xf32> to vector<8x32xf32>
    %2 = arith.truncf %1 : vector<8x32xf32> to vector<8x32xbf16>
    %c0_2 = arith.constant 0 : index
    %c0_3 = arith.constant 0 : index
    %3 = vector.load %arg7[%c0_2, %c0_3] : memref<32x64xbf16, #tpu.memory_space<vmem>>, vector<32x64xbf16>
    %cst = arith.constant dense<0.000000e+00> : vector<8x64xf32>
    %4 = tpu.matmul %2, %3, %cst {dimension_numbers = #tpu.dot_dimension_numbers<[1], [0], [0], [1], [0, 0, 1, 1], [], []>} : vector<8x32xbf16>, vector<32x64xbf16>, vector<8x64xf32> -> vector<8x64xf32>
    %c0_4 = arith.constant 0 : index
    %c0_5 = arith.constant 0 : index
    %5 = vector.load %arg8[%c0_4, %c0_5] : memref<1x64xf32, #tpu.memory_space<vmem>>, vector<1x64xf32>
    %6 = vector.broadcast %5 : vector<1x64xf32> to vector<8x64xf32>
    %7 = arith.addf %4, %6 : vector<8x64xf32>
    %8 = arith.truncf %7 : vector<8x64xf32> to vector<8x64xbf16>
    %c0_6 = arith.constant 0 : index
    %c0_7 = arith.constant 0 : index
    %c0_8 = arith.constant 0 : index
    %9 = vector.load %arg3[%c0_6, %c0_7, %c0_8] : memref<1x8x32xf32, #tpu.memory_space<vmem>>, vector<1x8x32xf32>
    %10 = vector.shape_cast %9 : vector<1x8x32xf32> to vector<8x32xf32>
    %11 = arith.truncf %10 : vector<8x32xf32> to vector<8x32xbf16>
    %c0_9 = arith.constant 0 : index
    %c0_10 = arith.constant 0 : index
    %12 = vector.load %arg9[%c0_9, %c0_10] : memref<32x64xbf16, #tpu.memory_space<vmem>>, vector<32x64xbf16>
    %cst_11 = arith.constant dense<0.000000e+00> : vector<8x64xf32>
    %13 = tpu.matmul %11, %12, %cst_11 {dimension_numbers = #tpu.dot_dimension_numbers<[1], [0], [0], [1], [0, 0, 1, 1], [], []>} : vector<8x32xbf16>, vector<32x64xbf16>, vector<8x64xf32> -> vector<8x64xf32>
    %c0_12 = arith.constant 0 : index
    %c0_13 = arith.constant 0 : index
    %14 = vector.load %arg10[%c0_12, %c0_13] : memref<1x64xf32, #tpu.memory_space<vmem>>, vector<1x64xf32>
    %15 = vector.broadcast %14 : vector<1x64xf32> to vector<8x64xf32>
    %16 = arith.addf %13, %15 : vector<8x64xf32>
    %17 = arith.truncf %16 : vector<8x64xf32> to vector<8x64xbf16>
    %c0_14 = arith.constant 0 : index
    %c0_15 = arith.constant 0 : index
    %c0_16 = arith.constant 0 : index
    %18 = vector.load %arg4[%c0_14, %c0_15, %c0_16] : memref<1x8x32xf32, #tpu.memory_space<vmem>>, vector<1x8x32xf32>
    %19 = vector.shape_cast %18 : vector<1x8x32xf32> to vector<8x32xf32>
    %20 = arith.truncf %19 : vector<8x32xf32> to vector<8x32xbf16>
    %c0_17 = arith.constant 0 : index
    %c0_18 = arith.constant 0 : index
    %21 = vector.load %arg11[%c0_17, %c0_18] : memref<32x64xbf16, #tpu.memory_space<vmem>>, vector<32x64xbf16>
    %cst_19 = arith.constant dense<0.000000e+00> : vector<8x64xf32>
    %22 = tpu.matmul %20, %21, %cst_19 {dimension_numbers = #tpu.dot_dimension_numbers<[1], [0], [0], [1], [0, 0, 1, 1], [], []>} : vector<8x32xbf16>, vector<32x64xbf16>, vector<8x64xf32> -> vector<8x64xf32>
    %c0_20 = arith.constant 0 : index
    %c0_21 = arith.constant 0 : index
    %23 = vector.load %arg12[%c0_20, %c0_21] : memref<1x64xf32, #tpu.memory_space<vmem>>, vector<1x64xf32>
    %24 = vector.broadcast %23 : vector<1x64xf32> to vector<8x64xf32>
    %25 = arith.addf %22, %24 : vector<8x64xf32>
    %26 = arith.truncf %25 : vector<8x64xf32> to vector<8x64xbf16>
    %c0_22 = arith.constant 0 : index
    %c0_23 = arith.constant 0 : index
    %c0_24 = arith.constant 0 : index
    %27 = vector.load %arg5[%c0_22, %c0_23, %c0_24] : memref<1x1x8xf32, #tpu.memory_space<vmem>>, vector<1x1x8xf32>
    %28 = vector.shape_cast %27 : vector<1x1x8xf32> to vector<1x8xf32>
    %29 = vector.extract_strided_slice %8 {offsets = [0, 0], sizes = [8, 16], strides = [1, 1]} : vector<8x64xbf16> to vector<8x16xbf16>
    %30 = vector.extract_strided_slice %17 {offsets = [0, 0], sizes = [8, 16], strides = [1, 1]} : vector<8x64xbf16> to vector<8x16xbf16>
    %cst_25 = arith.constant dense<0.000000e+00> : vector<8x8xf32>
    %31 = tpu.matmul %29, %30, %cst_25 {dimension_numbers = #tpu.dot_dimension_numbers<[1], [1], [0], [0], [0, 0, 1, 0], [], []>} : vector<8x16xbf16>, vector<8x16xbf16>, vector<8x8xf32> -> vector<8x8xf32>
    %32 = vector.broadcast %28 : vector<1x8xf32> to vector<8x8xf32>
    %33 = arith.addf %31, %32 : vector<8x8xf32>
    %cst_26 = arith.constant dense<0xFF800000> : vector<8xf32>
    %34 = vector.multi_reduction <maximumf>, %33, %cst_26 [1] : vector<8x8xf32> to vector<8xf32>
    %35 = vector.shape_cast %34 : vector<8xf32> to vector<8x1xf32>
    %36 = vector.broadcast %35 : vector<8x1xf32> to vector<8x8xf32>
    %37 = arith.subf %33, %36 : vector<8x8xf32>
    %38 = math.exp %37 : vector<8x8xf32>
    %cst_27 = arith.constant dense<0.000000e+00> : vector<8xf32>
    %39 = vector.multi_reduction <add>, %38, %cst_27 [1] : vector<8x8xf32> to vector<8xf32>
    %40 = vector.shape_cast %39 : vector<8xf32> to vector<8x1xf32>
    %41 = tpu.reciprocal %40 {approx = true} : vector<8x1xf32> -> vector<8x1xf32>
    %42 = vector.broadcast %41 : vector<8x1xf32> to vector<8x8xf32>
    %43 = arith.mulf %38, %42 : vector<8x8xf32>
    %44 = arith.truncf %43 : vector<8x8xf32> to vector<8x8xbf16>
    %45 = vector.extract_strided_slice %26 {offsets = [0, 0], sizes = [8, 16], strides = [1, 1]} : vector<8x64xbf16> to vector<8x16xbf16>
    %cst_28 = arith.constant dense<0.000000e+00> : vector<8x16xf32>
    %46 = tpu.matmul %44, %45, %cst_28 {dimension_numbers = #tpu.dot_dimension_numbers<[1], [0], [0], [1], [0, 0, 1, 1], [], []>} : vector<8x8xbf16>, vector<8x16xbf16>, vector<8x16xf32> -> vector<8x16xf32>
    %c0_29 = arith.constant 0 : index
    %c0_30 = arith.constant 0 : index
    %47 = vector.load %arg18[%c0_29, %c0_30] : memref<8x64xf32, #tpu.memory_space<vmem>>, vector<8x16xf32>
    tpu.vector_store %arg18[%c0_29, %c0_30], %46 {strides = array<i32>} : memref<8x64xf32, #tpu.memory_space<vmem>>, vector<8x16xf32>,
    %48 = vector.extract_strided_slice %8 {offsets = [0, 16], sizes = [8, 16], strides = [1, 1]} : vector<8x64xbf16> to vector<8x16xbf16>
    %49 = vector.extract_strided_slice %17 {offsets = [0, 16], sizes = [8, 16], strides = [1, 1]} : vector<8x64xbf16> to vector<8x16xbf16>
    %cst_31 = arith.constant dense<0.000000e+00> : vector<8x8xf32>
    %50 = tpu.matmul %48, %49, %cst_31 {dimension_numbers = #tpu.dot_dimension_numbers<[1], [1], [0], [0], [0, 0, 1, 0], [], []>} : vector<8x16xbf16>, vector<8x16xbf16>, vector<8x8xf32> -> vector<8x8xf32>
    %51 = vector.broadcast %28 : vector<1x8xf32> to vector<8x8xf32>
    %52 = arith.addf %50, %51 : vector<8x8xf32>
    %cst_32 = arith.constant dense<0xFF800000> : vector<8xf32>
    %53 = vector.multi_reduction <maximumf>, %52, %cst_32 [1] : vector<8x8xf32> to vector<8xf32>
    %54 = vector.shape_cast %53 : vector<8xf32> to vector<8x1xf32>
    %55 = vector.broadcast %54 : vector<8x1xf32> to vector<8x8xf32>
    %56 = arith.subf %52, %55 : vector<8x8xf32>
    %57 = math.exp %56 : vector<8x8xf32>
    %cst_33 = arith.constant dense<0.000000e+00> : vector<8xf32>
    %58 = vector.multi_reduction <add>, %57, %cst_33 [1] : vector<8x8xf32> to vector<8xf32>
    %59 = vector.shape_cast %58 : vector<8xf32> to vector<8x1xf32>
    %60 = tpu.reciprocal %59 {approx = true} : vector<8x1xf32> -> vector<8x1xf32>
    %61 = vector.broadcast %60 : vector<8x1xf32> to vector<8x8xf32>
    %62 = arith.mulf %57, %61 : vector<8x8xf32>
    %63 = arith.truncf %62 : vector<8x8xf32> to vector<8x8xbf16>
    %64 = vector.extract_strided_slice %26 {offsets = [0, 16], sizes = [8, 16], strides = [1, 1]} : vector<8x64xbf16> to vector<8x16xbf16>
    %cst_34 = arith.constant dense<0.000000e+00> : vector<8x16xf32>
    %65 = tpu.matmul %63, %64, %cst_34 {dimension_numbers = #tpu.dot_dimension_numbers<[1], [0], [0], [1], [0, 0, 1, 1], [], []>} : vector<8x8xbf16>, vector<8x16xbf16>, vector<8x16xf32> -> vector<8x16xf32>
    %c0_35 = arith.constant 0 : index
    %c16 = arith.constant 16 : index
    %66 = vector.load %arg18[%c0_35, %c16] : memref<8x64xf32, #tpu.memory_space<vmem>>, vector<8x16xf32>
    tpu.vector_store %arg18[%c0_35, %c16], %65 {strides = array<i32>} : memref<8x64xf32, #tpu.memory_space<vmem>>, vector<8x16xf32>,
    %67 = vector.extract_strided_slice %8 {offsets = [0, 32], sizes = [8, 16], strides = [1, 1]} : vector<8x64xbf16> to vector<8x16xbf16>
    %68 = vector.extract_strided_slice %17 {offsets = [0, 32], sizes = [8, 16], strides = [1, 1]} : vector<8x64xbf16> to vector<8x16xbf16>
    %cst_36 = arith.constant dense<0.000000e+00> : vector<8x8xf32>
    %69 = tpu.matmul %67, %68, %cst_36 {dimension_numbers = #tpu.dot_dimension_numbers<[1], [1], [0], [0], [0, 0, 1, 0], [], []>} : vector<8x16xbf16>, vector<8x16xbf16>, vector<8x8xf32> -> vector<8x8xf32>
    %70 = vector.broadcast %28 : vector<1x8xf32> to vector<8x8xf32>
    %71 = arith.addf %69, %70 : vector<8x8xf32>
    %cst_37 = arith.constant dense<0xFF800000> : vector<8xf32>
    %72 = vector.multi_reduction <maximumf>, %71, %cst_37 [1] : vector<8x8xf32> to vector<8xf32>
    %73 = vector.shape_cast %72 : vector<8xf32> to vector<8x1xf32>
    %74 = vector.broadcast %73 : vector<8x1xf32> to vector<8x8xf32>
    %75 = arith.subf %71, %74 : vector<8x8xf32>
    %76 = math.exp %75 : vector<8x8xf32>
    %cst_38 = arith.constant dense<0.000000e+00> : vector<8xf32>
    %77 = vector.multi_reduction <add>, %76, %cst_38 [1] : vector<8x8xf32> to vector<8xf32>
    %78 = vector.shape_cast %77 : vector<8xf32> to vector<8x1xf32>
    %79 = tpu.reciprocal %78 {approx = true} : vector<8x1xf32> -> vector<8x1xf32>
    %80 = vector.broadcast %79 : vector<8x1xf32> to vector<8x8xf32>
    %81 = arith.mulf %76, %80 : vector<8x8xf32>
    %82 = arith.truncf %81 : vector<8x8xf32> to vector<8x8xbf16>
    %83 = vector.extract_strided_slice %26 {offsets = [0, 32], sizes = [8, 16], strides = [1, 1]} : vector<8x64xbf16> to vector<8x16xbf16>
    %cst_39 = arith.constant dense<0.000000e+00> : vector<8x16xf32>
    %84 = tpu.matmul %82, %83, %cst_39 {dimension_numbers = #tpu.dot_dimension_numbers<[1], [0], [0], [1], [0, 0, 1, 1], [], []>} : vector<8x8xbf16>, vector<8x16xbf16>, vector<8x16xf32> -> vector<8x16xf32>
    %c0_40 = arith.constant 0 : index
    %c32 = arith.constant 32 : index
    %85 = vector.load %arg18[%c0_40, %c32] : memref<8x64xf32, #tpu.memory_space<vmem>>, vector<8x16xf32>
    tpu.vector_store %arg18[%c0_40, %c32], %84 {strides = array<i32>} : memref<8x64xf32, #tpu.memory_space<vmem>>, vector<8x16xf32>,
    %86 = vector.extract_strided_slice %8 {offsets = [0, 48], sizes = [8, 16], strides = [1, 1]} : vector<8x64xbf16> to vector<8x16xbf16>
    %87 = vector.extract_strided_slice %17 {offsets = [0, 48], sizes = [8, 16], strides = [1, 1]} : vector<8x64xbf16> to vector<8x16xbf16>
    %cst_41 = arith.constant dense<0.000000e+00> : vector<8x8xf32>
    %88 = tpu.matmul %86, %87, %cst_41 {dimension_numbers = #tpu.dot_dimension_numbers<[1], [1], [0], [0], [0, 0, 1, 0], [], []>} : vector<8x16xbf16>, vector<8x16xbf16>, vector<8x8xf32> -> vector<8x8xf32>
    %89 = vector.broadcast %28 : vector<1x8xf32> to vector<8x8xf32>
    %90 = arith.addf %88, %89 : vector<8x8xf32>
    %cst_42 = arith.constant dense<0xFF800000> : vector<8xf32>
    %91 = vector.multi_reduction <maximumf>, %90, %cst_42 [1] : vector<8x8xf32> to vector<8xf32>
    %92 = vector.shape_cast %91 : vector<8xf32> to vector<8x1xf32>
    %93 = vector.broadcast %92 : vector<8x1xf32> to vector<8x8xf32>
    %94 = arith.subf %90, %93 : vector<8x8xf32>
    %95 = math.exp %94 : vector<8x8xf32>
    %cst_43 = arith.constant dense<0.000000e+00> : vector<8xf32>
    %96 = vector.multi_reduction <add>, %95, %cst_43 [1] : vector<8x8xf32> to vector<8xf32>
    %97 = vector.shape_cast %96 : vector<8xf32> to vector<8x1xf32>
    %98 = tpu.reciprocal %97 {approx = true} : vector<8x1xf32> -> vector<8x1xf32>
    %99 = vector.broadcast %98 : vector<8x1xf32> to vector<8x8xf32>
    %100 = arith.mulf %95, %99 : vector<8x8xf32>
    %101 = arith.truncf %100 : vector<8x8xf32> to vector<8x8xbf16>
    %102 = vector.extract_strided_slice %26 {offsets = [0, 48], sizes = [8, 16], strides = [1, 1]} : vector<8x64xbf16> to vector<8x16xbf16>
    %cst_44 = arith.constant dense<0.000000e+00> : vector<8x16xf32>
    %103 = tpu.matmul %101, %102, %cst_44 {dimension_numbers = #tpu.dot_dimension_numbers<[1], [0], [0], [1], [0, 0, 1, 1], [], []>} : vector<8x8xbf16>, vector<8x16xbf16>, vector<8x16xf32> -> vector<8x16xf32>
    %c0_45 = arith.constant 0 : index
    %c48 = arith.constant 48 : index
    %104 = vector.load %arg18[%c0_45, %c48] : memref<8x64xf32, #tpu.memory_space<vmem>>, vector<8x16xf32>
    tpu.vector_store %arg18[%c0_45, %c48], %103 {strides = array<i32>} : memref<8x64xf32, #tpu.memory_space<vmem>>, vector<8x16xf32>,
    %c0_46 = arith.constant 0 : index
    %c0_47 = arith.constant 0 : index
    %105 = vector.load %arg18[%c0_46, %c0_47] : memref<8x64xf32, #tpu.memory_space<vmem>>, vector<8x64xf32>
    %106 = arith.truncf %105 : vector<8x64xf32> to vector<8x64xbf16>
    %c0_48 = arith.constant 0 : index
    %c0_49 = arith.constant 0 : index
    %107 = vector.load %arg13[%c0_48, %c0_49] : memref<64x32xbf16, #tpu.memory_space<vmem>>, vector<64x32xbf16>
    %cst_50 = arith.constant dense<0.000000e+00> : vector<8x32xf32>
    %108 = tpu.matmul %106, %107, %cst_50 {dimension_numbers = #tpu.dot_dimension_numbers<[1], [0], [0], [1], [0, 0, 1, 1], [], []>} : vector<8x64xbf16>, vector<64x32xbf16>, vector<8x32xf32> -> vector<8x32xf32>
    %c0_51 = arith.constant 0 : index
    %c0_52 = arith.constant 0 : index
    %109 = vector.load %arg14[%c0_51, %c0_52] : memref<1x32xf32, #tpu.memory_space<vmem>>, vector<1x32xf32>
    %110 = vector.broadcast %109 : vector<1x32xf32> to vector<8x32xf32>
    %111 = arith.addf %108, %110 : vector<8x32xf32>
    %c0_53 = arith.constant 0 : index
    %c0_54 = arith.constant 0 : index
    %c0_55 = arith.constant 0 : index
    %112 = vector.load %arg6[%c0_53, %c0_54, %c0_55] : memref<1x8x32xf32, #tpu.memory_space<vmem>>, vector<1x8x32xf32>
    %113 = vector.shape_cast %112 : vector<1x8x32xf32> to vector<8x32xf32>
    %114 = arith.addf %111, %113 : vector<8x32xf32>
    %cst_56 = arith.constant dense<0.000000e+00> : vector<8xf32>
    %115 = vector.multi_reduction <add>, %114, %cst_56 [1] : vector<8x32xf32> to vector<8xf32>
    %116 = vector.shape_cast %115 : vector<8xf32> to vector<8x1xf32>
    %cst_57 = arith.constant 3.200000e+01 : f32
    %117 = vector.broadcast %cst_57 : f32 to vector<8x1xf32>
    %118 = arith.divf %116, %117 : vector<8x1xf32>
    %119 = vector.broadcast %118 : vector<8x1xf32> to vector<8x32xf32>
    %120 = arith.subf %114, %119 : vector<8x32xf32>
    %121 = arith.mulf %120, %120 : vector<8x32xf32>
    %cst_58 = arith.constant dense<0.000000e+00> : vector<8xf32>
    %122 = vector.multi_reduction <add>, %121, %cst_58 [1] : vector<8x32xf32> to vector<8xf32>
    %123 = vector.shape_cast %122 : vector<8xf32> to vector<8x1xf32>
    %cst_59 = arith.constant 3.200000e+01 : f32
    %124 = vector.broadcast %cst_59 : f32 to vector<8x1xf32>
    %125 = arith.divf %123, %124 : vector<8x1xf32>
    %126 = vector.broadcast %118 : vector<8x1xf32> to vector<8x32xf32>
    %127 = arith.subf %114, %126 : vector<8x32xf32>
    %cst_60 = arith.constant 9.99999974E-6 : f32
    %128 = vector.broadcast %cst_60 : f32 to vector<8x1xf32>
    %129 = arith.addf %125, %128 : vector<8x1xf32>
    %130 = math.rsqrt %129 : vector<8x1xf32>
    %131 = vector.broadcast %130 : vector<8x1xf32> to vector<8x32xf32>
    %132 = arith.mulf %127, %131 : vector<8x32xf32>
    %c0_61 = arith.constant 0 : index
    %c0_62 = arith.constant 0 : index
    %133 = vector.load %arg15[%c0_61, %c0_62] : memref<1x32xf32, #tpu.memory_space<vmem>>, vector<1x32xf32>
    %134 = vector.broadcast %133 : vector<1x32xf32> to vector<8x32xf32>
    %135 = arith.mulf %132, %134 : vector<8x32xf32>
    %c0_63 = arith.constant 0 : index
    %c0_64 = arith.constant 0 : index
    %136 = vector.load %arg16[%c0_63, %c0_64] : memref<1x32xf32, #tpu.memory_space<vmem>>, vector<1x32xf32>
    %137 = vector.broadcast %136 : vector<1x32xf32> to vector<8x32xf32>
    %138 = arith.addf %135, %137 : vector<8x32xf32>
    %c0_65 = arith.constant 0 : index
    %c0_66 = arith.constant 0 : index
    %c0_67 = arith.constant 0 : index
    %139 = vector.load %arg17[%c0_65, %c0_66, %c0_67] : memref<1x8x32xf32, #tpu.memory_space<vmem>>, vector<1x8x32xf32>
    %140 = vector.shape_cast %139 : vector<1x8x32xf32> to vector<8x32xf32>
    %141 = vector.shape_cast %138 : vector<8x32xf32> to vector<1x8x32xf32>
    tpu.vector_store %arg17[%c0_65, %c0_66, %c0_67], %141 {strides = array<i32>} : memref<1x8x32xf32, #tpu.memory_space<vmem>>, vector<1x8x32xf32>,
    return
  }
  func.func @transform_0(%arg0: i32, %arg1: i32) -> (i32, i32, i32) {
    %c0_i32 = arith.constant 0 : i32
    %c0_i32_0 = arith.constant 0 : i32
    return %arg0, %arg1, %c0_i32 : i32, i32, i32
  }
  func.func @transform_1(%arg0: i32, %arg1: i32) -> (i32, i32, i32) {
    %c0_i32 = arith.constant 0 : i32
    %c0_i32_0 = arith.constant 0 : i32
    %c0_i32_1 = arith.constant 0 : i32
    return %arg0, %c0_i32, %c0_i32_0 : i32, i32, i32
  }
  func.func @transform_2(%arg0: i32, %arg1: i32) -> (i32, i32, i32) {
    %c0_i32 = arith.constant 0 : i32
    %c0_i32_0 = arith.constant 0 : i32
    %c0_i32_1 = arith.constant 0 : i32
    return %arg0, %c0_i32, %c0_i32_0 : i32, i32, i32
  }
  func.func @transform_3(%arg0: i32, %arg1: i32) -> (i32, i32, i32) {
    %c0_i32 = arith.constant 0 : i32
    %c0_i32_0 = arith.constant 0 : i32
    %c0_i32_1 = arith.constant 0 : i32
    return %arg0, %c0_i32, %c0_i32_0 : i32, i32, i32
  }
  func.func @transform_4(%arg0: i32, %arg1: i32) -> (i32, i32, i32) {
    %c0_i32 = arith.constant 0 : i32
    %c0_i32_0 = arith.constant 0 : i32
    return %arg0, %arg1, %c0_i32 : i32, i32, i32
  }
  func.func @transform_5(%arg0: i32, %arg1: i32) -> (i32, i32) {
    %c0_i32 = arith.constant 0 : i32
    %c0_i32_0 = arith.constant 0 : i32
    %c0_i32_1 = arith.constant 0 : i32
    return %c0_i32, %c0_i32_0 : i32, i32
  }
  func.func @transform_6(%arg0: i32, %arg1: i32) -> (i32, i32) {
    %c0_i32 = arith.constant 0 : i32
    %c0_i32_0 = arith.constant 0 : i32
    %c0_i32_1 = arith.constant 0 : i32
    return %c0_i32, %c0_i32_0 : i32, i32
  }
  func.func @transform_7(%arg0: i32, %arg1: i32) -> (i32, i32) {
    %c0_i32 = arith.constant 0 : i32
    %c0_i32_0 = arith.constant 0 : i32
    %c0_i32_1 = arith.constant 0 : i32
    return %c0_i32, %c0_i32_0 : i32, i32
  }
  func.func @transform_8(%arg0: i32, %arg1: i32) -> (i32, i32) {
    %c0_i32 = arith.constant 0 : i32
    %c0_i32_0 = arith.constant 0 : i32
    %c0_i32_1 = arith.constant 0 : i32
    return %c0_i32, %c0_i32_0 : i32, i32
  }
  func.func @transform_9(%arg0: i32, %arg1: i32) -> (i32, i32) {
    %c0_i32 = arith.constant 0 : i32
    %c0_i32_0 = arith.constant 0 : i32
    %c0_i32_1 = arith.constant 0 : i32
    return %c0_i32, %c0_i32_0 : i32, i32
  }
  func.func @transform_10(%arg0: i32, %arg1: i32) -> (i32, i32) {
    %c0_i32 = arith.constant 0 : i32
    %c0_i32_0 = arith.constant 0 : i32
    %c0_i32_1 = arith.constant 0 : i32
    return %c0_i32, %c0_i32_0 : i32, i32
  }
  func.func @transform_11(%arg0: i32, %arg1: i32) -> (i32, i32) {
    %c0_i32 = arith.constant 0 : i32
    %c0_i32_0 = arith.constant 0 : i32
    %c0_i32_1 = arith.constant 0 : i32
    return %c0_i32, %c0_i32_0 : i32, i32
  }
  func.func @transform_12(%arg0: i32, %arg1: i32) -> (i32, i32) {
    %c0_i32 = arith.constant 0 : i32
    %c0_i32_0 = arith.constant 0 : i32
    %c0_i32_1 = arith.constant 0 : i32
    return %c0_i32, %c0_i32_0 : i32, i32
  }
  func.func @transform_13(%arg0: i32, %arg1: i32) -> (i32, i32) {
    %c0_i32 = arith.constant 0 : i32
    %c0_i32_0 = arith.constant 0 : i32
    %c0_i32_1 = arith.constant 0 : i32
    return %c0_i32, %c0_i32_0 : i32, i32
  }
  func.func @transform_14(%arg0: i32, %arg1: i32) -> (i32, i32) {
    %c0_i32 = arith.constant 0 : i32
    %c0_i32_0 = arith.constant 0 : i32
    %c0_i32_1 = arith.constant 0 : i32
    return %c0_i32, %c0_i32_0 : i32, i32
  }
  func.func @transform_15(%arg0: i32, %arg1: i32) -> (i32, i32, i32) {
    %c0_i32 = arith.constant 0 : i32
    %c0_i32_0 = arith.constant 0 : i32
    return %arg0, %arg1, %c0_i32 : i32, i32, i32
  }
}

</mosaic_0001>

<llo_original>
// kernel: tpu_custom_call.1
$region0: #{tpu_custom_call.1}
  #allocation0 [shape = 'u32[]', space=smem, size = 0x4, offset = 0x4, fixed_abs, tag = 'smem constant byte address 0x4 - core index']
  #allocation1 [shape = 'u32[144,128]{1,0:T(1,128)}', space=vmem, size = 0x12000, scoped, tag = 'internal scratch']
  #allocation2 [shape = 'f32[8,64]{1,0:T(8,128)}', space=vmem, size = 0x1000, scoped, tag = 'scratch operand']
  %s0 = inlined_call_operand.vmem [shape: f32[2,8,32], index: 0, kind: input, shape index: {}]
  %s1 = inlined_call_operand.vmem [shape: f32[2,8,32], index: 1, kind: input, shape index: {}]
  %s2 = inlined_call_operand.vmem [shape: f32[2,8,32], index: 2, kind: input, shape index: {}]
  %s3 = inlined_call_operand.vmem [shape: f32[2,1,8], index: 3, kind: input, shape index: {}]
  %s4 = inlined_call_operand.hbm [shape: f32[2,8,32], index: 4, kind: input, shape index: {}]
  %s5 = inlined_call_operand.hbm [shape: bf16[32,64], index: 5, kind: input, shape index: {}]
  %s6 = inlined_call_operand.hbm [shape: f32[1,64], index: 6, kind: input, shape index: {}]
  %s7 = inlined_call_operand.hbm [shape: bf16[32,64], index: 7, kind: input, shape index: {}]
  %s8 = inlined_call_operand.hbm [shape: f32[1,64], index: 8, kind: input, shape index: {}]
  %s9 = inlined_call_operand.vmem [shape: bf16[32,64], index: 9, kind: input, shape index: {}]
  %s10 = inlined_call_operand.vmem [shape: f32[1,64], index: 10, kind: input, shape index: {}]
  %s11 = inlined_call_operand.vmem [shape: bf16[64,32], index: 11, kind: input, shape index: {}]
  %s12 = inlined_call_operand.vmem [shape: f32[1,32], index: 12, kind: input, shape index: {}]
  %s13 = inlined_call_operand.vmem [shape: f32[1,32], index: 13, kind: input, shape index: {}]
  %s14 = inlined_call_operand.vmem [shape: f32[1,32], index: 14, kind: input, shape index: {}]
  %s15 = inlined_call_operand.hbm [shape: f32[2,8,32], index: 15, kind: output, shape index: {}]
  %s16 = sld [smem:[#allocation0]]
  $region113: #{tpu_custom_call.1} parent=0
    _
  %s18 = ssub.s32 1, %s16
  %s19 = scalar_select 0, %s18, %s16
  $region1: #{tpu_custom_call.1} parent=0
    #allocation3 [shape = 'u8[8192]{0}', space=vmem, size = 0x2000, scoped, tag = 'input window, operand 4']
    #allocation4 [shape = 's32[2]{0}', space=sflag, size = 0x8, scoped, tag = 'scoped memory for tpu_custom_call.1']
    #allocation5 [shape = 's32[2]{0}', space=sflag, size = 0x8, scoped, tag = 'scoped memory for tpu_custom_call.1']
    #allocation6 [shape = 'u8[8192]{0}', space=vmem, size = 0x2000, scoped, tag = 'input window, operand 5, single buffered']
    #allocation7 [shape = 's32[1]{0}', space=sflag, size = 0x4, scoped, tag = 'scoped memory for tpu_custom_call.1']
    #allocation8 [shape = 'u8[512]{0}', space=vmem, size = 0x400, scoped, tag = 'input window, operand 6, single buffered']
    #allocation9 [shape = 'u8[8192]{0}', space=vmem, size = 0x2000, scoped, tag = 'input window, operand 7, single buffered']
    #allocation10 [shape = 's32[1]{0}', space=sflag, size = 0x4, scoped, tag = 'scoped memory for tpu_custom_call.1']
    #allocation11 [shape = 'u8[512]{0}', space=vmem, size = 0x400, scoped, tag = 'input window, operand 8, single buffered']
    #allocation12 [shape = 'u8[8192]{0}', space=vmem, size = 0x2000, scoped, tag = 'output window, operand 0']
    %20 = vsyncpa [#allocation4], 0
    %s21 = scalar_lea.sflag [#allocation4], 1
    %22 = vsyncpa %s21, 0
    %23 = vsyncpa [#allocation7], 0
    %24 = vsyncpa [#allocation10], 0
    %25 = vsyncpa [#allocation5], 0
    %s26 = scalar_lea.sflag [#allocation5], 1
    %27 = vsyncpa %s26, 0
    loop: start=0, step=1, limit=4
    $region2: #{tpu_custom_call.1} parent=1 // loop_pre_header
      _
    $region3: #{tpu_custom_call.1} parent=1 // loop_header
      %s29 = sphi 0, %s33
      %p30 = scmp.ge.s32.totalorder %s29, 4
      %s36 = sphi 0, %s48
      %s37 = sphi 0, %s44
      %s38 = sphi 0, %s36
      %s39 = sphi 0, %s37
      %s40 = sphi 0, %s38
      %s41 = sphi 0, %s39
      %s53 = sphi 0, %s55
      %s56 = sphi 0, %s53
      %s57 = sphi 0, %s56
      %s73 = sphi 0, %s57
      %s79 = sphi 0, %s81
      %s82 = sphi 0, %s79
      %s83 = sphi 0, %s82
      %s99 = sphi 0, %s83
      %s105 = sphi 0, %s107
      %s108 = sphi 0, %s105
      %s109 = sphi 0, %s108
      %s125 = sphi 0, %s109
      %s131 = sphi 0, %s133
      %s134 = sphi 0, %s131
      %s135 = sphi 0, %s134
      %s151 = sphi 0, %s135
      %s159 = sphi 0, %s161
      %s162 = sphi 0, %s159
      %s163 = sphi 0, %s162
      %s179 = sphi 0, %s163
      %s183 = sphi 0, %s183
      %s185 = sphi 0, %s183
      %s186 = sphi 0, %s185
      %s200 = sphi 0, %s186
      %s204 = sphi 0, %s204
      %s206 = sphi 0, %s204
      %s207 = sphi 0, %s206
      %s221 = sphi 0, %s207
      %s225 = sphi 0, %s225
      %s227 = sphi 0, %s225
      %s228 = sphi 0, %s227
      %s242 = sphi 0, %s228
      %s246 = sphi 0, %s246
      %s248 = sphi 0, %s246
      %s249 = sphi 0, %s248
      %s263 = sphi 0, %s249
      %s267 = sphi 0, %s267
      %s269 = sphi 0, %s267
      %s270 = sphi 0, %s269
      %s284 = sphi 0, %s270
      %s288 = sphi 0, %s288
      %s290 = sphi 0, %s288
      %s291 = sphi 0, %s290
      %s305 = sphi 0, %s291
      %s309 = sphi 0, %s309
      %s311 = sphi 0, %s309
      %s312 = sphi 0, %s311
      %s326 = sphi 0, %s312
      %s330 = sphi 0, %s330
      %s332 = sphi 0, %s330
      %s333 = sphi 0, %s332
      %s347 = sphi 0, %s333
      %s351 = sphi 0, %s351
      %s353 = sphi 0, %s351
      %s354 = sphi 0, %s353
      %s368 = sphi 0, %s354
      %s372 = sphi 0, %s372
      %s374 = sphi 0, %s372
      %s375 = sphi 0, %s374
      %s389 = sphi 0, %s375
      %s397 = sphi 0, %s399
      %s400 = sphi 0, %s397
      %s401 = sphi 0, %s400
      %s417 = sphi 0, %s401
    $region4: #{tpu_custom_call.1} parent=1 // loop_header_branch
      %32 = sbr.rel (%p30) target = $region8
    $region5: #{tpu_custom_call.1} parent=1 // loop_body
      %s34 = ssub.s32 %s29, 1
      %s35 = ssub.s32 %s29, 2
      %s42 = sadd.s32 1, %s37
      %p43 = scmp.ge.s32.totalorder %s42, 1
      %s44 = scalar_select %p43, 0, %s42
      %s45 = sadd.s32 1, %s36
      %s46 = scalar_select %p43, %s45, %s36
      %p47 = scmp.ge.s32.totalorder %s46, 2
      %s48 = scalar_select %p47, 0, %s46
      %s49 = ssub.s32 %s36, %s48
      %s50 = ssub.s32 %s37, %s44
      %s51 = sor.u32 %s49, %s50
      %p52 = scmp.eq.s32.totalorder %s51, 0
      %s54 = sadd.s32 %s53, 1
      %s55 = scalar_select %p52, %s53, %s54
      %p58 = pneg %p52
      %p59 = scmp.eq.s32.totalorder %s29, 1
      %p60 = por %p58, %p59
      %p61 = scmp.ne.s32.totalorder %s53, %s56
      %p62 = scmp.eq.s32.totalorder %s29, 0
      %p63 = por %p61, %p62
      %p64 = scmp.ne.s32.totalorder %s53, %s56
      %p65 = scmp.eq.s32.totalorder %s34, 1
      %p66 = por %p64, %p65
      %p67 = scmp.ne.s32.totalorder %s56, %s57
      %p68 = scmp.eq.s32.totalorder %s34, 0
      %p69 = por %p67, %p68
      %p70 = scmp.ne.s32.totalorder %s56, %s57
      %p71 = scmp.eq.s32.totalorder %s35, 1
      %p72 = por %p70, %p71
      %p74 = scmp.ne.s32.totalorder %s57, %s73
      %p75 = scmp.eq.s32.totalorder %s35, 0
      %p76 = por %p74, %p75
      %s77 = ssub.s32 %s36, %s48
      %p78 = scmp.eq.s32.totalorder %s77, 0
      %s80 = sadd.s32 %s79, 1
      %s81 = scalar_select %p78, %s79, %s80
      %p84 = pneg %p78
      %p85 = scmp.eq.s32.totalorder %s29, 1
      %p86 = por %p84, %p85
      %p87 = scmp.ne.s32.totalorder %s79, %s82
      %p88 = scmp.eq.s32.totalorder %s29, 0
      %p89 = por %p87, %p88
      %p90 = scmp.ne.s32.totalorder %s79, %s82
      %p91 = scmp.eq.s32.totalorder %s34, 1
      %p92 = por %p90, %p91
      %p93 = scmp.ne.s32.totalorder %s82, %s83
      %p94 = scmp.eq.s32.totalorder %s34, 0
      %p95 = por %p93, %p94
      %p96 = scmp.ne.s32.totalorder %s82, %s83
      %p97 = scmp.eq.s32.totalorder %s35, 1
      %p98 = por %p96, %p97
      %p100 = scmp.ne.s32.totalorder %s83, %s99
      %p101 = scmp.eq.s32.totalorder %s35, 0
      %p102 = por %p100, %p101
      %s103 = ssub.s32 %s36, %s48
      %p104 = scmp.eq.s32.totalorder %s103, 0
      %s106 = sadd.s32 %s105, 1
      %s107 = scalar_select %p104, %s105, %s106
      %p110 = pneg %p104
      %p111 = scmp.eq.s32.totalorder %s29, 1
      %p112 = por %p110, %p111
      %p113 = scmp.ne.s32.totalorder %s105, %s108
      %p114 = scmp.eq.s32.totalorder %s29, 0
      %p115 = por %p113, %p114
      %p116 = scmp.ne.s32.totalorder %s105, %s108
      %p117 = scmp.eq.s32.totalorder %s34, 1
      %p118 = por %p116, %p117
      %p119 = scmp.ne.s32.totalorder %s108, %s109
      %p120 = scmp.eq.s32.totalorder %s34, 0
      %p121 = por %p119, %p120
      %p122 = scmp.ne.s32.totalorder %s108, %s109
      %p123 = scmp.eq.s32.totalorder %s35, 1
      %p124 = por %p122, %p123
      %p126 = scmp.ne.s32.totalorder %s109, %s125
      %p127 = scmp.eq.s32.totalorder %s35, 0
      %p128 = por %p126, %p127
      %s129 = ssub.s32 %s36, %s48
      %p130 = scmp.eq.s32.totalorder %s129, 0
      %s132 = sadd.s32 %s131, 1
      %s133 = scalar_select %p130, %s131, %s132
      %p136 = pneg %p130
      %p137 = scmp.eq.s32.totalorder %s29, 1
      %p138 = por %p136, %p137
      %p139 = scmp.ne.s32.totalorder %s131, %s134
      %p140 = scmp.eq.s32.totalorder %s29, 0
      %p141 = por %p139, %p140
      %p142 = scmp.ne.s32.totalorder %s131, %s134
      %p143 = scmp.eq.s32.totalorder %s34, 1
      %p144 = por %p142, %p143
      %p145 = scmp.ne.s32.totalorder %s134, %s135
      %p146 = scmp.eq.s32.totalorder %s34, 0
      %p147 = por %p145, %p146
      %p148 = scmp.ne.s32.totalorder %s134, %s135
      %p149 = scmp.eq.s32.totalorder %s35, 1
      %p150 = por %p148, %p149
      %p152 = scmp.ne.s32.totalorder %s135, %s151
      %p153 = scmp.eq.s32.totalorder %s35, 0
      %p154 = por %p152, %p153
      %s155 = ssub.s32 %s36, %s48
      %s156 = ssub.s32 %s37, %s44
      %s157 = sor.u32 %s155, %s156
      %p158 = scmp.eq.s32.totalorder %s157, 0
      %s160 = sadd.s32 %s159, 1
      %s161 = scalar_select %p158, %s159, %s160
      %p164 = pneg %p158
      %p165 = scmp.eq.s32.totalorder %s29, 1
      %p166 = por %p164, %p165
      %p167 = scmp.ne.s32.totalorder %s159, %s162
      %p168 = scmp.eq.s32.totalorder %s29, 0
      %p169 = por %p167, %p168
      %p170 = scmp.ne.s32.totalorder %s159, %s162
      %p171 = scmp.eq.s32.totalorder %s34, 1
      %p172 = por %p170, %p171
      %p173 = scmp.ne.s32.totalorder %s162, %s163
      %p174 = scmp.eq.s32.totalorder %s34, 0
      %p175 = por %p173, %p174
      %p176 = scmp.ne.s32.totalorder %s162, %s163
      %p177 = scmp.eq.s32.totalorder %s35, 1
      %p178 = por %p176, %p177
      %p180 = scmp.ne.s32.totalorder %s163, %s179
      %p181 = scmp.eq.s32.totalorder %s35, 0
      %p182 = por %p180, %p181
      %s184 = sadd.s32 %s183, 1
      %p187 = scmp.eq.s32.totalorder %s29, 1
      %p188 = scmp.ne.s32.totalorder %s183, %s185
      %p189 = scmp.eq.s32.totalorder %s29, 0
      %p190 = por %p188, %p189
      %p191 = scmp.ne.s32.totalorder %s183, %s185
      %p192 = scmp.eq.s32.totalorder %s34, 1
      %p193 = por %p191, %p192
      %p194 = scmp.ne.s32.totalorder %s185, %s186
      %p195 = scmp.eq.s32.totalorder %s34, 0
      %p196 = por %p194, %p195
      %p197 = scmp.ne.s32.totalorder %s185, %s186
      %p198 = scmp.eq.s32.totalorder %s35, 1
      %p199 = por %p197, %p198
      %p201 = scmp.ne.s32.totalorder %s186, %s200
      %p202 = scmp.eq.s32.totalorder %s35, 0
      %p203 = por %p201, %p202
      %s205 = sadd.s32 %s204, 1
      %p208 = scmp.eq.s32.totalorder %s29, 1
      %p209 = scmp.ne.s32.totalorder %s204, %s206
      %p210 = scmp.eq.s32.totalorder %s29, 0
      %p211 = por %p209, %p210
      %p212 = scmp.ne.s32.totalorder %s204, %s206
      %p213 = scmp.eq.s32.totalorder %s34, 1
      %p214 = por %p212, %p213
      %p215 = scmp.ne.s32.totalorder %s206, %s207
      %p216 = scmp.eq.s32.totalorder %s34, 0
      %p217 = por %p215, %p216
      %p218 = scmp.ne.s32.totalorder %s206, %s207
      %p219 = scmp.eq.s32.totalorder %s35, 1
      %p220 = por %p218, %p219
      %p222 = scmp.ne.s32.totalorder %s207, %s221
      %p223 = scmp.eq.s32.totalorder %s35, 0
      %p224 = por %p222, %p223
      %s226 = sadd.s32 %s225, 1
      %p229 = scmp.eq.s32.totalorder %s29, 1
      %p230 = scmp.ne.s32.totalorder %s225, %s227
      %p231 = scmp.eq.s32.totalorder %s29, 0
      %p232 = por %p230, %p231
      %p233 = scmp.ne.s32.totalorder %s225, %s227
      %p234 = scmp.eq.s32.totalorder %s34, 1
      %p235 = por %p233, %p234
      %p236 = scmp.ne.s32.totalorder %s227, %s228
      %p237 = scmp.eq.s32.totalorder %s34, 0
      %p238 = por %p236, %p237
      %p239 = scmp.ne.s32.totalorder %s227, %s228
      %p240 = scmp.eq.s32.totalorder %s35, 1
      %p241 = por %p239, %p240
      %p243 = scmp.ne.s32.totalorder %s228, %s242
      %p244 = scmp.eq.s32.totalorder %s35, 0
      %p245 = por %p243, %p244
      %s247 = sadd.s32 %s246, 1
      %p250 = scmp.eq.s32.totalorder %s29, 1
      %p251 = scmp.ne.s32.totalorder %s246, %s248
      %p252 = scmp.eq.s32.totalorder %s29, 0
      %p253 = por %p251, %p252
      %p254 = scmp.ne.s32.totalorder %s246, %s248
      %p255 = scmp.eq.s32.totalorder %s34, 1
      %p256 = por %p254, %p255
      %p257 = scmp.ne.s32.totalorder %s248, %s249
      %p258 = scmp.eq.s32.totalorder %s34, 0
      %p259 = por %p257, %p258
      %p260 = scmp.ne.s32.totalorder %s248, %s249
      %p261 = scmp.eq.s32.totalorder %s35, 1
      %p262 = por %p260, %p261
      %p264 = scmp.ne.s32.totalorder %s249, %s263
      %p265 = scmp.eq.s32.totalorder %s35, 0
      %p266 = por %p264, %p265
      %s268 = sadd.s32 %s267, 1
      %p271 = scmp.eq.s32.totalorder %s29, 1
      %p272 = scmp.ne.s32.totalorder %s267, %s269
      %p273 = scmp.eq.s32.totalorder %s29, 0
      %p274 = por %p272, %p273
      %p275 = scmp.ne.s32.totalorder %s267, %s269
      %p276 = scmp.eq.s32.totalorder %s34, 1
      %p277 = por %p275, %p276
      %p278 = scmp.ne.s32.totalorder %s269, %s270
      %p279 = scmp.eq.s32.totalorder %s34, 0
      %p280 = por %p278, %p279
      %p281 = scmp.ne.s32.totalorder %s269, %s270
      %p282 = scmp.eq.s32.totalorder %s35, 1
      %p283 = por %p281, %p282
      %p285 = scmp.ne.s32.totalorder %s270, %s284
      %p286 = scmp.eq.s32.totalorder %s35, 0
      %p287 = por %p285, %p286
      %s289 = sadd.s32 %s288, 1
      %p292 = scmp.eq.s32.totalorder %s29, 1
      %p293 = scmp.ne.s32.totalorder %s288, %s290
      %p294 = scmp.eq.s32.totalorder %s29, 0
      %p295 = por %p293, %p294
      %p296 = scmp.ne.s32.totalorder %s288, %s290
      %p297 = scmp.eq.s32.totalorder %s34, 1
      %p298 = por %p296, %p297
      %p299 = scmp.ne.s32.totalorder %s290, %s291
      %p300 = scmp.eq.s32.totalorder %s34, 0
      %p301 = por %p299, %p300
      %p302 = scmp.ne.s32.totalorder %s290, %s291
      %p303 = scmp.eq.s32.totalorder %s35, 1
      %p304 = por %p302, %p303
      %p306 = scmp.ne.s32.totalorder %s291, %s305
      %p307 = scmp.eq.s32.totalorder %s35, 0
      %p308 = por %p306, %p307
      %s310 = sadd.s32 %s309, 1
      %p313 = scmp.eq.s32.totalorder %s29, 1
      %p314 = scmp.ne.s32.totalorder %s309, %s311
      %p315 = scmp.eq.s32.totalorder %s29, 0
      %p316 = por %p314, %p315
      %p317 = scmp.ne.s32.totalorder %s309, %s311
      %p318 = scmp.eq.s32.totalorder %s34, 1
      %p319 = por %p317, %p318
      %p320 = scmp.ne.s32.totalorder %s311, %s312
      %p321 = scmp.eq.s32.totalorder %s34, 0
      %p322 = por %p320, %p321
      %p323 = scmp.ne.s32.totalorder %s311, %s312
      %p324 = scmp.eq.s32.totalorder %s35, 1
      %p325 = por %p323, %p324
      %p327 = scmp.ne.s32.totalorder %s312, %s326
      %p328 = scmp.eq.s32.totalorder %s35, 0
      %p329 = por %p327, %p328
      %s331 = sadd.s32 %s330, 1
      %p334 = scmp.eq.s32.totalorder %s29, 1
      %p335 = scmp.ne.s32.totalorder %s330, %s332
      %p336 = scmp.eq.s32.totalorder %s29, 0
      %p337 = por %p335, %p336
      %p338 = scmp.ne.s32.totalorder %s330, %s332
      %p339 = scmp.eq.s32.totalorder %s34, 1
      %p340 = por %p338, %p339
      %p341 = scmp.ne.s32.totalorder %s332, %s333
      %p342 = scmp.eq.s32.totalorder %s34, 0
      %p343 = por %p341, %p342
      %p344 = scmp.ne.s32.totalorder %s332, %s333
      %p345 = scmp.eq.s32.totalorder %s35, 1
      %p346 = por %p344, %p345
      %p348 = scmp.ne.s32.totalorder %s333, %s347
      %p349 = scmp.eq.s32.totalorder %s35, 0
      %p350 = por %p348, %p349
      %s352 = sadd.s32 %s351, 1
      %p355 = scmp.eq.s32.totalorder %s29, 1
      %p356 = scmp.ne.s32.totalorder %s351, %s353
      %p357 = scmp.eq.s32.totalorder %s29, 0
      %p358 = por %p356, %p357
      %p359 = scmp.ne.s32.totalorder %s351, %s353
      %p360 = scmp.eq.s32.totalorder %s34, 1
      %p361 = por %p359, %p360
      %p362 = scmp.ne.s32.totalorder %s353, %s354
      %p363 = scmp.eq.s32.totalorder %s34, 0
      %p364 = por %p362, %p363
      %p365 = scmp.ne.s32.totalorder %s353, %s354
      %p366 = scmp.eq.s32.totalorder %s35, 1
      %p367 = por %p365, %p366
      %p369 = scmp.ne.s32.totalorder %s354, %s368
      %p370 = scmp.eq.s32.totalorder %s35, 0
      %p371 = por %p369, %p370
      %s373 = sadd.s32 %s372, 1
      %p376 = scmp.eq.s32.totalorder %s29, 1
      %p377 = scmp.ne.s32.totalorder %s372, %s374
      %p378 = scmp.eq.s32.totalorder %s29, 0
      %p379 = por %p377, %p378
      %p380 = scmp.ne.s32.totalorder %s372, %s374
      %p381 = scmp.eq.s32.totalorder %s34, 1
      %p382 = por %p380, %p381
      %p383 = scmp.ne.s32.totalorder %s374, %s375
      %p384 = scmp.eq.s32.totalorder %s34, 0
      %p385 = por %p383, %p384
      %p386 = scmp.ne.s32.totalorder %s374, %s375
      %p387 = scmp.eq.s32.totalorder %s35, 1
      %p388 = por %p386, %p387
      %p390 = scmp.ne.s32.totalorder %s375, %s389
      %p391 = scmp.eq.s32.totalorder %s35, 0
      %p392 = por %p390, %p391
      %s393 = ssub.s32 %s36, %s48
      %s394 = ssub.s32 %s37, %s44
      %s395 = sor.u32 %s393, %s394
      %p396 = scmp.eq.s32.totalorder %s395, 0
      %s398 = sadd.s32 %s397, 1
      %s399 = scalar_select %p396, %s397, %s398
      %p402 = pneg %p396
      %p403 = scmp.eq.s32.totalorder %s29, 1
      %p404 = por %p402, %p403
      %p405 = scmp.ne.s32.totalorder %s397, %s400
      %p406 = scmp.eq.s32.totalorder %s29, 0
      %p407 = por %p405, %p406
      %p408 = scmp.ne.s32.totalorder %s397, %s400
      %p409 = scmp.eq.s32.totalorder %s34, 1
      %p410 = por %p408, %p409
      %p411 = scmp.ne.s32.totalorder %s400, %s401
      %p412 = scmp.eq.s32.totalorder %s34, 0
      %p413 = por %p411, %p412
      %p414 = scmp.ne.s32.totalorder %s400, %s401
      %p415 = scmp.eq.s32.totalorder %s35, 1
      %p416 = por %p414, %p415
      %p418 = scmp.ne.s32.totalorder %s401, %s417
      %p419 = scmp.eq.s32.totalorder %s35, 0
      %p420 = por %p418, %p419
      %p421 = scmp.le.s32.totalorder 1, %s29
      %p422 = scmp.lt.s32.totalorder %s29, 3
      %p423 = pnand %p421, %p422
      %p424 = pneg %p423
      // Predicated region
      $region9: #{tpu_custom_call.1} parent=5 // pred_check
        _
      $region10: #{tpu_custom_call.1} parent=5 // pred_check_branch
        %426 = sbr.rel (%p423) target = $region12
      $region11: #{tpu_custom_call.1} parent=5 // pred_region
        %s427 = ssub.s32 %s29, 1
        // Predicated region
        $region13: #{tpu_custom_call.1} parent=11 // pred_check
          %p428 = pneg %p196
        $region14: #{tpu_custom_call.1} parent=11 // pred_check_branch
          %430 = sbr.rel (%p428) target = $region16
        $region15: #{tpu_custom_call.1} parent=11 // pred_region
          %s432 = ssub.s32 256, 256
          %433 = vsyncadd [#allocation7], %s432
          %s434 = sshll.u32 [#allocation6], 4
          %s435 = int_to_ptr.vmem [resolvable:$true] %s434
          %440 = dma.hbm_to_vmem [thread:$0]  %s5, 256, %s435, [#allocation7], 64, 64, 4
        $region16: #{tpu_custom_call.1} parent=11 // pred_fallthru
          _
        // Predicated region
        $region17: #{tpu_custom_call.1} parent=11 // pred_check
          %p441 = pneg %p217
        $region18: #{tpu_custom_call.1} parent=11 // pred_check_branch
          %443 = sbr.rel (%p441) target = $region20
        $region19: #{tpu_custom_call.1} parent=11 // pred_region
          %s445 = ssub.s32 16, 16
          %446 = vsyncadd [#allocation7], %s445
          %s448 = sshll.u32 [#allocation8], 4
          %s449 = int_to_ptr.vmem [resolvable:$true] %s448
          %451 = dma.hbm_to_vmem [thread:$0]  %s6, 16, %s449, [#allocation7]
        $region20: #{tpu_custom_call.1} parent=11 // pred_fallthru
          _
        // Predicated region
        $region21: #{tpu_custom_call.1} parent=11 // pred_check
          %p452 = pneg %p238
        $region22: #{tpu_custom_call.1} parent=11 // pred_check_branch
          %454 = sbr.rel (%p452) target = $region24
        $region23: #{tpu_custom_call.1} parent=11 // pred_region
          %s456 = ssub.s32 256, 256
          %457 = vsyncadd [#allocation10], %s456
          %s458 = sshll.u32 [#allocation9], 4
          %s459 = int_to_ptr.vmem [resolvable:$true] %s458
          %464 = dma.hbm_to_vmem [thread:$0]  %s7, 256, %s459, [#allocation10], 64, 64, 4
        $region24: #{tpu_custom_call.1} parent=11 // pred_fallthru
          _
        // Predicated region
        $region25: #{tpu_custom_call.1} parent=11 // pred_check
          %p465 = pneg %p259
        $region26: #{tpu_custom_call.1} parent=11 // pred_check_branch
          %467 = sbr.rel (%p465) target = $region28
        $region27: #{tpu_custom_call.1} parent=11 // pred_region
          %s469 = ssub.s32 16, 16
          %470 = vsyncadd [#allocation10], %s469
          %s472 = sshll.u32 [#allocation11], 4
          %s473 = int_to_ptr.vmem [resolvable:$true] %s472
          %475 = dma.hbm_to_vmem [thread:$0]  %s8, 16, %s473, [#allocation10]
        $region28: #{tpu_custom_call.1} parent=11 // pred_fallthru
          _
        // Predicated region
        $region29: #{tpu_custom_call.1} parent=11 // pred_check
          %p476 = pneg %p280
        $region30: #{tpu_custom_call.1} parent=11 // pred_check_branch
          %478 = sbr.rel (%p476) target = $region32
        $region31: #{tpu_custom_call.1} parent=11 // pred_region
          _
        $region32: #{tpu_custom_call.1} parent=11 // pred_fallthru
          _
        // Predicated region
        $region33: #{tpu_custom_call.1} parent=11 // pred_check
          %p479 = pneg %p301
        $region34: #{tpu_custom_call.1} parent=11 // pred_check_branch
          %481 = sbr.rel (%p479) target = $region36
        $region35: #{tpu_custom_call.1} parent=11 // pred_region
          _
        $region36: #{tpu_custom_call.1} parent=11 // pred_fallthru
          _
        // Predicated region
        $region37: #{tpu_custom_call.1} parent=11 // pred_check
          %p482 = pneg %p322
        $region38: #{tpu_custom_call.1} parent=11 // pred_check_branch
          %484 = sbr.rel (%p482) target = $region40
        $region39: #{tpu_custom_call.1} parent=11 // pred_region
          _
        $region40: #{tpu_custom_call.1} parent=11 // pred_fallthru
          _
        // Predicated region
        $region41: #{tpu_custom_call.1} parent=11 // pred_check
          %p485 = pneg %p343
        $region42: #{tpu_custom_call.1} parent=11 // pred_check_branch
          %487 = sbr.rel (%p485) target = $region44
        $region43: #{tpu_custom_call.1} parent=11 // pred_region
          _
        $region44: #{tpu_custom_call.1} parent=11 // pred_fallthru
          _
        // Predicated region
        $region45: #{tpu_custom_call.1} parent=11 // pred_check
          %p488 = pneg %p364
        $region46: #{tpu_custom_call.1} parent=11 // pred_check_branch
          %490 = sbr.rel (%p488) target = $region48
        $region47: #{tpu_custom_call.1} parent=11 // pred_region
          _
        $region48: #{tpu_custom_call.1} parent=11 // pred_fallthru
          _
        // Predicated region
        $region49: #{tpu_custom_call.1} parent=11 // pred_check
          %p491 = pneg %p385
        $region50: #{tpu_custom_call.1} parent=11 // pred_check_branch
          %493 = sbr.rel (%p491) target = $region52
        $region51: #{tpu_custom_call.1} parent=11 // pred_region
          _
        $region52: #{tpu_custom_call.1} parent=11 // pred_fallthru
          _
      $region12: #{tpu_custom_call.1} parent=5 // pred_fallthru
        _
      %p494 = scmp.lt.s32.totalorder %s29, 2
      // Predicated region
      $region53: #{tpu_custom_call.1} parent=5 // pred_check
        %p495 = pneg %p494
      $region54: #{tpu_custom_call.1} parent=5 // pred_check_branch
        %497 = sbr.rel (%p495) target = $region56
      $region55: #{tpu_custom_call.1} parent=5 // pred_region
        // Predicated region
        $region57: #{tpu_custom_call.1} parent=55 // pred_check
          %p498 = pneg %p63
        $region58: #{tpu_custom_call.1} parent=55 // pred_check_branch
          %500 = sbr.rel (%p498) target = $region60
        $region59: #{tpu_custom_call.1} parent=55 // pred_region
          %p501 = scmp.lt.s32.totalorder %s36, 1
          %s502 = scalar_select %p501, %s36, 1
          %p503 = scmp.lt.s32.totalorder %s37, 0
          %s504 = scalar_select %p503, %s37, 0
          %s505 = sadd.s32 %s504, %s502
          %s506 = smul.addr %s505, 8
          %s507 = scalar_lea.vmem %s0, %s506
        $region60: #{tpu_custom_call.1} parent=55 // pred_fallthru
          _
        // Predicated region
        $region61: #{tpu_custom_call.1} parent=55 // pred_check
          %p508 = pneg %p89
        $region62: #{tpu_custom_call.1} parent=55 // pred_check_branch
          %510 = sbr.rel (%p508) target = $region64
        $region63: #{tpu_custom_call.1} parent=55 // pred_region
          %p511 = scmp.lt.s32.totalorder %s36, 1
          %s512 = scalar_select %p511, %s36, 1
          %s513 = smul.addr %s512, 8
          %s514 = scalar_lea.vmem %s1, %s513
        $region64: #{tpu_custom_call.1} parent=55 // pred_fallthru
          _
        // Predicated region
        $region65: #{tpu_custom_call.1} parent=55 // pred_check
          %p515 = pneg %p115
        $region66: #{tpu_custom_call.1} parent=55 // pred_check_branch
          %517 = sbr.rel (%p515) target = $region68
        $region67: #{tpu_custom_call.1} parent=55 // pred_region
          %p518 = scmp.lt.s32.totalorder %s36, 1
          %s519 = scalar_select %p518, %s36, 1
          %s520 = smul.addr %s519, 8
          %s521 = scalar_lea.vmem %s2, %s520
        $region68: #{tpu_custom_call.1} parent=55 // pred_fallthru
          _
        // Predicated region
        $region69: #{tpu_custom_call.1} parent=55 // pred_check
          %p522 = pneg %p141
        $region70: #{tpu_custom_call.1} parent=55 // pred_check_branch
          %524 = sbr.rel (%p522) target = $region72
        $region71: #{tpu_custom_call.1} parent=55 // pred_region
          %p525 = scmp.lt.s32.totalorder %s36, 1
          %s526 = scalar_select %p525, %s36, 1
          %s527 = scalar_lea.vmem %s3, %s526
        $region72: #{tpu_custom_call.1} parent=55 // pred_fallthru
          _
        // Predicated region
        $region73: #{tpu_custom_call.1} parent=55 // pred_check
          %p528 = pneg %p169
        $region74: #{tpu_custom_call.1} parent=55 // pred_check_branch
          %530 = sbr.rel (%p528) target = $region76
        $region75: #{tpu_custom_call.1} parent=55 // pred_region
          %s531 = sand.u32 %s159, 1
          %s532 = scalar_lea.sflag [#allocation4], %s531
          %s533 = sand.u32 %s159, 1
          %s534 = smul.addr %s533, 8
          %s535 = scalar_lea.vmem [#allocation3], %s534
          %s537 = ssub.s32 128, 128
          %538 = vsyncadd %s532, %s537
          %s539 = sadd.s32 %s37, %s36
          %s540 = smul.addr %s539, 128
          %s541 = scalar_lea.hbm %s4, %s540
          %s543 = sshll.u32 %s535, 4
          %s544 = int_to_ptr.vmem [resolvable:$true] %s543
          %546 = dma.hbm_to_vmem [thread:$0]  %s541, 128, %s544, %s532
        $region76: #{tpu_custom_call.1} parent=55 // pred_fallthru
          _
      $region56: #{tpu_custom_call.1} parent=5 // pred_fallthru
        _
      %p547 = scmp.le.s32.totalorder 1, %s29
      %p548 = scmp.lt.s32.totalorder %s29, 3
      %p549 = pnand %p547, %p548
      %p550 = pneg %p549
      // Predicated region
      $region77: #{tpu_custom_call.1} parent=5 // pred_check
        _
      $region78: #{tpu_custom_call.1} parent=5 // pred_check_branch
        %552 = sbr.rel (%p549) target = $region80
      $region79: #{tpu_custom_call.1} parent=5 // pred_region
        %s553 = ssub.s32 %s29, 1
        %s554 = sand.u32 %s162, 1
        %s555 = scalar_lea.sflag [#allocation4], %s554
        %s556 = sand.u32 %s162, 1
        %s557 = smul.addr %s556, 8
        %s558 = scalar_lea.vmem [#allocation3], %s557
        // Predicated region
        $region81: #{tpu_custom_call.1} parent=79 // pred_check
          %p559 = pneg %p175
        $region82: #{tpu_custom_call.1} parent=79 // pred_check_branch
          %561 = sbr.rel (%p559) target = $region84
        $region83: #{tpu_custom_call.1} parent=79 // pred_region
          %562 = dma.done %s555, 128
        $region84: #{tpu_custom_call.1} parent=79 // pred_fallthru
          _
        // Predicated region
        $region85: #{tpu_custom_call.1} parent=79 // pred_check
          %p563 = pneg %p196
        $region86: #{tpu_custom_call.1} parent=79 // pred_check_branch
          %565 = sbr.rel (%p563) target = $region88
        $region87: #{tpu_custom_call.1} parent=79 // pred_region
          %566 = dma.done [#allocation7], 256
        $region88: #{tpu_custom_call.1} parent=79 // pred_fallthru
          _
        // Predicated region
        $region89: #{tpu_custom_call.1} parent=79 // pred_check
          %p567 = pneg %p217
        $region90: #{tpu_custom_call.1} parent=79 // pred_check_branch
          %569 = sbr.rel (%p567) target = $region92
        $region91: #{tpu_custom_call.1} parent=79 // pred_region
          %570 = dma.done [#allocation7], 16
        $region92: #{tpu_custom_call.1} parent=79 // pred_fallthru
          _
        // Predicated region
        $region93: #{tpu_custom_call.1} parent=79 // pred_check
          %p571 = pneg %p238
        $region94: #{tpu_custom_call.1} parent=79 // pred_check_branch
          %573 = sbr.rel (%p571) target = $region96
        $region95: #{tpu_custom_call.1} parent=79 // pred_region
          %574 = dma.done [#allocation10], 256
        $region96: #{tpu_custom_call.1} parent=79 // pred_fallthru
          _
        // Predicated region
        $region97: #{tpu_custom_call.1} parent=79 // pred_check
          %p575 = pneg %p259
        $region98: #{tpu_custom_call.1} parent=79 // pred_check_branch
          %577 = sbr.rel (%p575) target = $region100
        $region99: #{tpu_custom_call.1} parent=79 // pred_region
          %578 = dma.done [#allocation10], 16
        $region100: #{tpu_custom_call.1} parent=79 // pred_fallthru
          _
        %p579 = scmp.lt.s32.totalorder %s38, 1
        %s580 = scalar_select %p579, %s38, 1
        %p581 = scmp.lt.s32.totalorder %s39, 0
        %s582 = scalar_select %p581, %s39, 0
        %s583 = sadd.s32 %s582, %s580
        %s584 = smul.addr %s583, 8
        %s585 = scalar_lea.vmem %s0, %s584
        %p586 = pneg %p69
        %p587 = pneg %p66
        %p588 = scmp.lt.s32.totalorder %s38, 1
        %s589 = scalar_select %p588, %s38, 1
        %s590 = smul.addr %s589, 8
        %s591 = scalar_lea.vmem %s1, %s590
        %p592 = pneg %p95
        %p593 = pneg %p92
        %p594 = scmp.lt.s32.totalorder %s38, 1
        %s595 = scalar_select %p594, %s38, 1
        %s596 = smul.addr %s595, 8
        %s597 = scalar_lea.vmem %s2, %s596
        %p598 = pneg %p121
        %p599 = pneg %p118
        %p600 = scmp.lt.s32.totalorder %s38, 1
        %s601 = scalar_select %p600, %s38, 1
        %s602 = scalar_lea.vmem %s3, %s601
        %p603 = pneg %p147
        %p604 = pneg %p144
        %s605 = sand.u32 %s162, 1
        %s606 = scalar_lea.sflag [#allocation4], %s605
        %s607 = sand.u32 %s162, 1
        %s608 = smul.addr %s607, 8
        %s609 = scalar_lea.vmem [#allocation3], %s608
        %p610 = pneg %p175
        %p611 = pneg %p172
        %p612 = pneg %p196
        %p613 = pneg %p193
        %p614 = pneg %p217
        %p615 = pneg %p214
        %p616 = pneg %p238
        %p617 = pneg %p235
        %p618 = pneg %p259
        %p619 = pneg %p256
        %p620 = pneg %p280
        %p621 = pneg %p277
        %p622 = pneg %p301
        %p623 = pneg %p298
        %p624 = pneg %p322
        %p625 = pneg %p319
        %p626 = pneg %p343
        %p627 = pneg %p340
        %p628 = pneg %p364
        %p629 = pneg %p361
        %p630 = pneg %p385
        %p631 = pneg %p382
        %p632 = pneg %p413
        %p633 = pneg %p410
        %s634 = sand.u32 %s400, 1
        %s635 = scalar_lea.sflag [#allocation5], %s634
        %s636 = sand.u32 %s400, 1
        %s637 = smul.addr %s636, 8
        %s638 = scalar_lea.vmem [#allocation12], %s637
        %p639 = scmp.lt.s32.totalorder %s38, 1
        %s640 = scalar_select %p639, %s38, 1
        %p641 = scmp.lt.s32.totalorder %s39, 0
        %s642 = scalar_select %p641, %s39, 0
        %s643 = sadd.s32 %s642, %s640
        %s644 = smul.addr %s643, 8
        %s645 = scalar_lea.vmem %s0, %s644
        %p646 = scmp.lt.s32.totalorder %s38, 1
        %s647 = scalar_select %p646, %s38, 1
        %s648 = smul.addr %s647, 8
        %s649 = scalar_lea.vmem %s1, %s648
        %p650 = scmp.lt.s32.totalorder %s38, 1
        %s651 = scalar_select %p650, %s38, 1
        %s652 = smul.addr %s651, 8
        %s653 = scalar_lea.vmem %s2, %s652
        %p654 = scmp.lt.s32.totalorder %s38, 1
        %s655 = scalar_select %p654, %s38, 1
        %s656 = scalar_lea.vmem %s3, %s655
        %v658 = vld [vmem:[%s645] sm:$0xff]
        %v659 = vpack.c.bf16 %v658, %v658
        %v660 = vld [vmem:[#allocation6] sm:$0xf]
        %v661 = vld [vmem:[#allocation6 + $0x4] sm:$0xf]
        %v662 = vld [vmem:[#allocation6 + $0x8] sm:$0xf]
        %v663 = vld [vmem:[#allocation6 + $0xc] sm:$0xf]
        %v664 = vld [vmem:[#allocation8] sm:$0x1]
        %v666 = vlaneseq
        %v667 = vshrl.u32 %v666, 7
        %v668 = vsub.s32 0, %v667
        %v669 = vrot.slane %v664, %v668
        %v675 = vunpack.c.l.b16 %v660
        %v676 = vunpack.c.l.b16 %v661
        %v677 = vunpack.c.l.b16 %v662
        %v678 = vunpack.c.l.b16 %v663
        %v679 = vpack.c.b16 %v676, %v675
        %v680 = vpack.c.b16 %v678, %v677
        %vm683 = vcmask 261120
        %v685 = vsel %vm683, %v659, 0
        %687 = vmatprep.subr.bf16.mxu0 0
        %688 = vmatpush1.bf16.msra.mxu0 %v679
        %689 = vmatprep.subr.bf16.mxu0 0
        %690 = vmatpush1.bf16.msra.mxu0 %v680
        %691 = vmatprep.subr.bf16.mxu0 0
        %692 = vmatpush1.bf16.msra.mxu0 0
        %693 = vmatprep.subr.bf16.mxu0 0
        %694 = vmatpush1.bf16.msra.mxu0 0
        %695 = vmatprep.subr.bf16.mxu0 0
        %696 = vmatpush1.bf16.msra.mxu0 0
        %697 = vmatprep.subr.bf16.mxu0 0
        %698 = vmatpush1.bf16.msra.mxu0 0
        %699 = vmatprep.subr.bf16.mxu0 0
        %700 = vmatpush1.bf16.msra.mxu0 0
        %701 = vmatprep.subr.bf16.mxu0 0
        %702 = vmatpush1.bf16.msra.mxu0 0
        %703 = vmatprep.subr.bf16.mxu0 0
        %704 = vmatpush1.bf16.msra.mxu0 0
        %705 = vmatprep.subr.bf16.mxu0 0
        %706 = vmatpush1.bf16.msra.mxu0 0
        %707 = vmatprep.subr.bf16.mxu0 0
        %708 = vmatpush1.bf16.msra.mxu0 0
        %709 = vmatprep.subr.bf16.mxu0 0
        %710 = vmatpush1.bf16.msra.mxu0 0
        %711 = vmatprep.subr.bf16.mxu0 0
        %712 = vmatpush1.bf16.msra.mxu0 0
        %713 = vmatprep.subr.bf16.mxu0 0
        %714 = vmatpush1.bf16.msra.mxu0 0
        %715 = vmatprep.subr.bf16.mxu0 0
        %716 = vmatpush1.bf16.msra.mxu0 0
        %717 = vmatprep.subr.bf16.mxu0 0
        %718 = vmatpush1.bf16.msra.mxu0 0
        %719 = vmatprep.mubr.bf16.mxu0 0
        %720 = vmatmul.mubr.bf16.gmra.mrb[0].mxu0 %v685
        %v721 = vpop.f32.mrb[0].mxu0
        %v722 = vadd.f32 %v669, %v721
        %v723 = vpop.f32.mrb[0].mxu0
        %v724 = vpop.f32.mrb[0].mxu0
        %v725 = vpop.f32.mrb[0].mxu0
        %726 = vdwg.mxu0
        %v727 = vpack.c.bf16 %v722, %v722
        %v728 = vld [vmem:[%s649] sm:$0xff]
        %v729 = vpack.c.bf16 %v728, %v728
        %v730 = vld [vmem:[#allocation9] sm:$0xf]
        %v731 = vld [vmem:[#allocation9 + $0x4] sm:$0xf]
        %v732 = vld [vmem:[#allocation9 + $0x8] sm:$0xf]
        %v733 = vld [vmem:[#allocation9 + $0xc] sm:$0xf]
        %v734 = vld [vmem:[#allocation11] sm:$0x1]
        %v736 = vlaneseq
        %v737 = vshrl.u32 %v736, 7
        %v738 = vsub.s32 0, %v737
        %v739 = vrot.slane %v734, %v738
        %v745 = vunpack.c.l.b16 %v730
        %v746 = vunpack.c.l.b16 %v731
        %v747 = vunpack.c.l.b16 %v732
        %v748 = vunpack.c.l.b16 %v733
        %v749 = vpack.c.b16 %v746, %v745
        %v750 = vpack.c.b16 %v748, %v747
        %v754 = vsel %vm683, %v729, 0
        %756 = vmatprep.subr.bf16.mxu0 0
        %757 = vmatpush1.bf16.msra.mxu0 %v749
        %758 = vmatprep.subr.bf16.mxu0 0
        %759 = vmatpush1.bf16.msra.mxu0 %v750
        %760 = vmatprep.subr.bf16.mxu0 0
        %761 = vmatpush1.bf16.msra.mxu0 0
        %762 = vmatprep.subr.bf16.mxu0 0
        %763 = vmatpush1.bf16.msra.mxu0 0
        %764 = vmatprep.subr.bf16.mxu0 0
        %765 = vmatpush1.bf16.msra.mxu0 0
        %766 = vmatprep.subr.bf16.mxu0 0
        %767 = vmatpush1.bf16.msra.mxu0 0
        %768 = vmatprep.subr.bf16.mxu0 0
        %769 = vmatpush1.bf16.msra.mxu0 0
        %770 = vmatprep.subr.bf16.mxu0 0
        %771 = vmatpush1.bf16.msra.mxu0 0
        %772 = vmatprep.subr.bf16.mxu0 0
        %773 = vmatpush1.bf16.msra.mxu0 0
        %774 = vmatprep.subr.bf16.mxu0 0
        %775 = vmatpush1.bf16.msra.mxu0 0
        %776 = vmatprep.subr.bf16.mxu0 0
        %777 = vmatpush1.bf16.msra.mxu0 0
        %778 = vmatprep.subr.bf16.mxu0 0
        %779 = vmatpush1.bf16.msra.mxu0 0
        %780 = vmatprep.subr.bf16.mxu0 0
        %781 = vmatpush1.bf16.msra.mxu0 0
        %782 = vmatprep.subr.bf16.mxu0 0
        %783 = vmatpush1.bf16.msra.mxu0 0
        %784 = vmatprep.subr.bf16.mxu0 0
        %785 = vmatpush1.bf16.msra.mxu0 0
        %786 = vmatprep.subr.bf16.mxu0 0
        %787 = vmatpush1.bf16.msra.mxu0 0
        %788 = vmatprep.mubr.bf16.mxu0 0
        %789 = vmatmul.mubr.bf16.gmra.mrb[0].mxu0 %v754
        %v790 = vpop.f32.mrb[0].mxu0
        %v791 = vadd.f32 %v739, %v790
        %v792 = vpop.f32.mrb[0].mxu0
        %v793 = vpop.f32.mrb[0].mxu0
        %v794 = vpop.f32.mrb[0].mxu0
        %795 = vdwg.mxu0
        %v796 = vpack.c.bf16 %v791, %v791
        %v797 = vld [vmem:[%s653] sm:$0xff]
        %v798 = vpack.c.bf16 %v797, %v797
        %v799 = vld [vmem:[%s9] sm:$0xf]
        %v800 = vld [vmem:[%s9 + $0x4] sm:$0xf]
        %v801 = vld [vmem:[%s9 + $0x8] sm:$0xf]
        %v802 = vld [vmem:[%s9 + $0xc] sm:$0xf]
        %v803 = vld [vmem:[%s10] sm:$0x1]
        %v805 = vlaneseq
        %v806 = vshrl.u32 %v805, 7
        %v807 = vsub.s32 0, %v806
        %v808 = vrot.slane %v803, %v807
        %v814 = vunpack.c.l.b16 %v799
        %v815 = vunpack.c.l.b16 %v800
        %v816 = vunpack.c.l.b16 %v801
        %v817 = vunpack.c.l.b16 %v802
        %v818 = vpack.c.b16 %v815, %v814
        %v819 = vpack.c.b16 %v817, %v816
        %v823 = vsel %vm683, %v798, 0
        %825 = vmatprep.subr.bf16.mxu0 0
        %826 = vmatpush1.bf16.msra.mxu0 %v818
        %827 = vmatprep.subr.bf16.mxu0 0
        %828 = vmatpush1.bf16.msra.mxu0 %v819
        %829 = vmatprep.subr.bf16.mxu0 0
        %830 = vmatpush1.bf16.msra.mxu0 0
        %831 = vmatprep.subr.bf16.mxu0 0
        %832 = vmatpush1.bf16.msra.mxu0 0
        %833 = vmatprep.subr.bf16.mxu0 0
        %834 = vmatpush1.bf16.msra.mxu0 0
        %835 = vmatprep.subr.bf16.mxu0 0
        %836 = vmatpush1.bf16.msra.mxu0 0
        %837 = vmatprep.subr.bf16.mxu0 0
        %838 = vmatpush1.bf16.msra.mxu0 0
        %839 = vmatprep.subr.bf16.mxu0 0
        %840 = vmatpush1.bf16.msra.mxu0 0
        %841 = vmatprep.subr.bf16.mxu0 0
        %842 = vmatpush1.bf16.msra.mxu0 0
        %843 = vmatprep.subr.bf16.mxu0 0
        %844 = vmatpush1.bf16.msra.mxu0 0
        %845 = vmatprep.subr.bf16.mxu0 0
        %846 = vmatpush1.bf16.msra.mxu0 0
        %847 = vmatprep.subr.bf16.mxu0 0
        %848 = vmatpush1.bf16.msra.mxu0 0
        %849 = vmatprep.subr.bf16.mxu0 0
        %850 = vmatpush1.bf16.msra.mxu0 0
        %851 = vmatprep.subr.bf16.mxu0 0
        %852 = vmatpush1.bf16.msra.mxu0 0
        %853 = vmatprep.subr.bf16.mxu0 0
        %854 = vmatpush1.bf16.msra.mxu0 0
        %855 = vmatprep.subr.bf16.mxu0 0
        %856 = vmatpush1.bf16.msra.mxu0 0
        %857 = vmatprep.mubr.bf16.mxu0 0
        %858 = vmatmul.mubr.bf16.gmra.mrb[0].mxu0 %v823
        %v859 = vpop.f32.mrb[0].mxu0
        %v860 = vadd.f32 %v808, %v859
        %v861 = vpop.f32.mrb[0].mxu0
        %v862 = vpop.f32.mrb[0].mxu0
        %v863 = vpop.f32.mrb[0].mxu0
        %864 = vdwg.mxu0
        %v865 = vpack.c.bf16 %v860, %v860
        %v866 = vld [vmem:[%s656] sm:$0x1]
        %v868 = vlaneseq
        %v869 = vshrl.u32 %v868, 7
        %v870 = vsub.s32 0, %v869
        %v871 = vrot.slane %v866, %v870
        %vm873 = vcmask 130048
        %v875 = vsel %vm873, %v727, 0
        %v878 = vsel %vm873, %v796, 0
        %880 = vmatprep.subr.bf16.mxu0 0
        %881 = vmatpush1.bf16.xpose.msra.mxu0 %v878
        %882 = vmatprep.subr.bf16.mxu0 0
        %883 = vmatpush1.bf16.xpose.msra.mxu0 0
        %884 = vmatprep.subr.bf16.mxu0 0
        %885 = vmatpush1.bf16.xpose.msra.mxu0 0
        %886 = vmatprep.subr.bf16.mxu0 0
        %887 = vmatpush1.bf16.xpose.msra.mxu0 0
        %888 = vmatprep.subr.bf16.mxu0 0
        %889 = vmatpush1.bf16.xpose.msra.mxu0 0
        %890 = vmatprep.subr.bf16.mxu0 0
        %891 = vmatpush1.bf16.xpose.msra.mxu0 0
        %892 = vmatprep.subr.bf16.mxu0 0
        %893 = vmatpush1.bf16.xpose.msra.mxu0 0
        %894 = vmatprep.subr.bf16.mxu0 0
        %895 = vmatpush1.bf16.xpose.msra.mxu0 0
        %896 = vmatprep.subr.bf16.mxu0 0
        %897 = vmatpush1.bf16.xpose.msra.mxu0 0
        %898 = vmatprep.subr.bf16.mxu0 0
        %899 = vmatpush1.bf16.xpose.msra.mxu0 0
        %900 = vmatprep.subr.bf16.mxu0 0
        %901 = vmatpush1.bf16.xpose.msra.mxu0 0
        %902 = vmatprep.subr.bf16.mxu0 0
        %903 = vmatpush1.bf16.xpose.msra.mxu0 0
        %904 = vmatprep.subr.bf16.mxu0 0
        %905 = vmatpush1.bf16.xpose.msra.mxu0 0
        %906 = vmatprep.subr.bf16.mxu0 0
        %907 = vmatpush1.bf16.xpose.msra.mxu0 0
        %908 = vmatprep.subr.bf16.mxu0 0
        %909 = vmatpush1.bf16.xpose.msra.mxu0 0
        %910 = vmatprep.subr.bf16.mxu0 0
        %911 = vmatpush1.bf16.xpose.msra.mxu0 0
        %912 = vmatprep.mubr.bf16.mxu0 0
        %913 = vmatmul.mubr.bf16.gmra.mrb[0].mxu0 %v875
        %v914 = vpop.f32.mrb[0].mxu0
        %v915 = vadd.f32 %v871, %v914
        %v916 = vpop.f32.mrb[0].mxu0
        %v917 = vpop.f32.mrb[0].mxu0
        %v918 = vpop.f32.mrb[0].mxu0
        %919 = vdwg.mxu0
        %vm920 = vcmask 64512
        %v921 = vsel %vm920, %v915, -inf
        %922 = vmax.xlane.f32.xlu0 %v921
        %v923 = vpop.xlane.xlu0 %922
        %v924 = vsub.f32 %v915, %v923
        %v925 = vmul.f32 %v924, 1.442695
        %v926 = vpow.pop %v925
        %v927 = vsel %vm920, %v926, 0.0
        %928 = vadd.xlane.f32.xlu0 %v927
        %v929 = vpop.xlane.xlu0 %928
        %v930 = vrcp.pop %v929
        %v931 = vmul.f32 %v926, %v930
        %v932 = vpack.c.bf16 %v931, %v931
        %v934 = vsel %vm920, %v932, 0
        %vm936 = vcmask 1043456
        %v938 = vsel %vm936, %v865, 0
        %940 = vmatprep.subr.bf16.mxu0 0
        %941 = vmatpush1.bf16.msra.mxu0 %v938
        %942 = vmatprep.subr.bf16.mxu0 0
        %943 = vmatpush1.bf16.msra.mxu0 0
        %944 = vmatprep.subr.bf16.mxu0 0
        %945 = vmatpush1.bf16.msra.mxu0 0
        %946 = vmatprep.subr.bf16.mxu0 0
        %947 = vmatpush1.bf16.msra.mxu0 0
        %948 = vmatprep.subr.bf16.mxu0 0
        %949 = vmatpush1.bf16.msra.mxu0 0
        %950 = vmatprep.subr.bf16.mxu0 0
        %951 = vmatpush1.bf16.msra.mxu0 0
        %952 = vmatprep.subr.bf16.mxu0 0
        %953 = vmatpush1.bf16.msra.mxu0 0
        %954 = vmatprep.subr.bf16.mxu0 0
        %955 = vmatpush1.bf16.msra.mxu0 0
        %956 = vmatprep.subr.bf16.mxu0 0
        %957 = vmatpush1.bf16.msra.mxu0 0
        %958 = vmatprep.subr.bf16.mxu0 0
        %959 = vmatpush1.bf16.msra.mxu0 0
        %960 = vmatprep.subr.bf16.mxu0 0
        %961 = vmatpush1.bf16.msra.mxu0 0
        %962 = vmatprep.subr.bf16.mxu0 0
        %963 = vmatpush1.bf16.msra.mxu0 0
        %964 = vmatprep.subr.bf16.mxu0 0
        %965 = vmatpush1.bf16.msra.mxu0 0
        %966 = vmatprep.subr.bf16.mxu0 0
        %967 = vmatpush1.bf16.msra.mxu0 0
        %968 = vmatprep.subr.bf16.mxu0 0
        %969 = vmatpush1.bf16.msra.mxu0 0
        %970 = vmatprep.subr.bf16.mxu0 0
        %971 = vmatpush1.bf16.msra.mxu0 0
        %972 = vmatprep.mubr.bf16.mxu0 0
        %973 = vmatmul.mubr.bf16.gmra.mrb[0].mxu0 %v934
        %v974 = vpop.f32.mrb[0].mxu0
        %v975 = vadd.f32 0.0, %v974
        %v976 = vpop.f32.mrb[0].mxu0
        %v977 = vpop.f32.mrb[0].mxu0
        %v978 = vpop.f32.mrb[0].mxu0
        %979 = vdwg.mxu0
        %980 = vst.msk [vmem:[#allocation2] sm:$0xff] %vm873, %v975
        %982 = vrot.lane.b32.xlu0 %v727, 112
        %v983 = vpop.permute.xlu0 %982
        %985 = vrot.lane.b32.xlu0 %v796, 112
        %v986 = vpop.permute.xlu0 %985
        %v988 = vsel %vm873, %v983, 0
        %v991 = vsel %vm873, %v986, 0
        %993 = vmatprep.subr.bf16.mxu0 0
        %994 = vmatpush1.bf16.xpose.msra.mxu0 %v991
        %995 = vmatprep.subr.bf16.mxu0 0
        %996 = vmatpush1.bf16.xpose.msra.mxu0 0
        %997 = vmatprep.subr.bf16.mxu0 0
        %998 = vmatpush1.bf16.xpose.msra.mxu0 0
        %999 = vmatprep.subr.bf16.mxu0 0
        %1000 = vmatpush1.bf16.xpose.msra.mxu0 0
        %1001 = vmatprep.subr.bf16.mxu0 0
        %1002 = vmatpush1.bf16.xpose.msra.mxu0 0
        %1003 = vmatprep.subr.bf16.mxu0 0
        %1004 = vmatpush1.bf16.xpose.msra.mxu0 0
        %1005 = vmatprep.subr.bf16.mxu0 0
        %1006 = vmatpush1.bf16.xpose.msra.mxu0 0
        %1007 = vmatprep.subr.bf16.mxu0 0
        %1008 = vmatpush1.bf16.xpose.msra.mxu0 0
        %1009 = vmatprep.subr.bf16.mxu0 0
        %1010 = vmatpush1.bf16.xpose.msra.mxu0 0
        %1011 = vmatprep.subr.bf16.mxu0 0
        %1012 = vmatpush1.bf16.xpose.msra.mxu0 0
        %1013 = vmatprep.subr.bf16.mxu0 0
        %1014 = vmatpush1.bf16.xpose.msra.mxu0 0
        %1015 = vmatprep.subr.bf16.mxu0 0
        %1016 = vmatpush1.bf16.xpose.msra.mxu0 0
        %1017 = vmatprep.subr.bf16.mxu0 0
        %1018 = vmatpush1.bf16.xpose.msra.mxu0 0
        %1019 = vmatprep.subr.bf16.mxu0 0
        %1020 = vmatpush1.bf16.xpose.msra.mxu0 0
        %1021 = vmatprep.subr.bf16.mxu0 0
        %1022 = vmatpush1.bf16.xpose.msra.mxu0 0
        %1023 = vmatprep.subr.bf16.mxu0 0
        %1024 = vmatpush1.bf16.xpose.msra.mxu0 0
        %1025 = vmatprep.mubr.bf16.mxu0 0
        %1026 = vmatmul.mubr.bf16.gmra.mrb[0].mxu0 %v988
        %v1027 = vpop.f32.mrb[0].mxu0
        %v1028 = vadd.f32 %v871, %v1027
        %v1029 = vpop.f32.mrb[0].mxu0
        %v1030 = vpop.f32.mrb[0].mxu0
        %v1031 = vpop.f32.mrb[0].mxu0
        %1032 = vdwg.mxu0
        %v1033 = vsel %vm920, %v1028, -inf
        %1034 = vmax.xlane.f32.xlu0 %v1033
        %v1035 = vpop.xlane.xlu0 %1034
        %v1036 = vsub.f32 %v1028, %v1035
        %v1037 = vmul.f32 %v1036, 1.442695
        %v1038 = vpow.pop %v1037
        %v1039 = vsel %vm920, %v1038, 0.0
        %1040 = vadd.xlane.f32.xlu0 %v1039
        %v1041 = vpop.xlane.xlu0 %1040
        %v1042 = vrcp.pop %v1041
        %v1043 = vmul.f32 %v1038, %v1042
        %v1044 = vpack.c.bf16 %v1043, %v1043
        %1046 = vrot.lane.b32.xlu0 %v865, 112
        %v1047 = vpop.permute.xlu0 %1046
        %v1049 = vsel %vm920, %v1044, 0
        %v1052 = vsel %vm936, %v1047, 0
        %1054 = vmatprep.subr.bf16.mxu0 0
        %1055 = vmatpush1.bf16.msra.mxu0 %v1052
        %1056 = vmatprep.subr.bf16.mxu0 0
        %1057 = vmatpush1.bf16.msra.mxu0 0
        %1058 = vmatprep.subr.bf16.mxu0 0
        %1059 = vmatpush1.bf16.msra.mxu0 0
        %1060 = vmatprep.subr.bf16.mxu0 0
        %1061 = vmatpush1.bf16.msra.mxu0 0
        %1062 = vmatprep.subr.bf16.mxu0 0
        %1063 = vmatpush1.bf16.msra.mxu0 0
        %1064 = vmatprep.subr.bf16.mxu0 0
        %1065 = vmatpush1.bf16.msra.mxu0 0
        %1066 = vmatprep.subr.bf16.mxu0 0
        %1067 = vmatpush1.bf16.msra.mxu0 0
        %1068 = vmatprep.subr.bf16.mxu0 0
        %1069 = vmatpush1.bf16.msra.mxu0 0
        %1070 = vmatprep.subr.bf16.mxu0 0
        %1071 = vmatpush1.bf16.msra.mxu0 0
        %1072 = vmatprep.subr.bf16.mxu0 0
        %1073 = vmatpush1.bf16.msra.mxu0 0
        %1074 = vmatprep.subr.bf16.mxu0 0
        %1075 = vmatpush1.bf16.msra.mxu0 0
        %1076 = vmatprep.subr.bf16.mxu0 0
        %1077 = vmatpush1.bf16.msra.mxu0 0
        %1078 = vmatprep.subr.bf16.mxu0 0
        %1079 = vmatpush1.bf16.msra.mxu0 0
        %1080 = vmatprep.subr.bf16.mxu0 0
        %1081 = vmatpush1.bf16.msra.mxu0 0
        %1082 = vmatprep.subr.bf16.mxu0 0
        %1083 = vmatpush1.bf16.msra.mxu0 0
        %1084 = vmatprep.subr.bf16.mxu0 0
        %1085 = vmatpush1.bf16.msra.mxu0 0
        %1086 = vmatprep.mubr.bf16.mxu0 0
        %1087 = vmatmul.mubr.bf16.gmra.mrb[0].mxu0 %v1049
        %v1088 = vpop.f32.mrb[0].mxu0
        %v1089 = vadd.f32 0.0, %v1088
        %v1090 = vpop.f32.mrb[0].mxu0
        %v1091 = vpop.f32.mrb[0].mxu0
        %v1092 = vpop.f32.mrb[0].mxu0
        %1093 = vdwg.mxu0
        %1095 = vrot.lane.b32.xlu0 %v1089, 16
        %v1096 = vpop.permute.xlu0 %1095
        %vm1098 = vcmask 261248
        %1099 = vst.msk [vmem:[#allocation2] sm:$0xff] %vm1098, %v1096
        %1100 = vrot.lane.b32.xlu0 %v727, 96
        %v1101 = vpop.permute.xlu0 %1100
        %1102 = vrot.lane.b32.xlu0 %v796, 96
        %v1103 = vpop.permute.xlu0 %1102
        %v1105 = vsel %vm873, %v1101, 0
        %v1108 = vsel %vm873, %v1103, 0
        %1110 = vmatprep.subr.bf16.mxu0 0
        %1111 = vmatpush1.bf16.xpose.msra.mxu0 %v1108
        %1112 = vmatprep.subr.bf16.mxu0 0
        %1113 = vmatpush1.bf16.xpose.msra.mxu0 0
        %1114 = vmatprep.subr.bf16.mxu0 0
        %1115 = vmatpush1.bf16.xpose.msra.mxu0 0
        %1116 = vmatprep.subr.bf16.mxu0 0
        %1117 = vmatpush1.bf16.xpose.msra.mxu0 0
        %1118 = vmatprep.subr.bf16.mxu0 0
        %1119 = vmatpush1.bf16.xpose.msra.mxu0 0
        %1120 = vmatprep.subr.bf16.mxu0 0
        %1121 = vmatpush1.bf16.xpose.msra.mxu0 0
        %1122 = vmatprep.subr.bf16.mxu0 0
        %1123 = vmatpush1.bf16.xpose.msra.mxu0 0
        %1124 = vmatprep.subr.bf16.mxu0 0
        %1125 = vmatpush1.bf16.xpose.msra.mxu0 0
        %1126 = vmatprep.subr.bf16.mxu0 0
        %1127 = vmatpush1.bf16.xpose.msra.mxu0 0
        %1128 = vmatprep.subr.bf16.mxu0 0
        %1129 = vmatpush1.bf16.xpose.msra.mxu0 0
        %1130 = vmatprep.subr.bf16.mxu0 0
        %1131 = vmatpush1.bf16.xpose.msra.mxu0 0
        %1132 = vmatprep.subr.bf16.mxu0 0
        %1133 = vmatpush1.bf16.xpose.msra.mxu0 0
        %1134 = vmatprep.subr.bf16.mxu0 0
        %1135 = vmatpush1.bf16.xpose.msra.mxu0 0
        %1136 = vmatprep.subr.bf16.mxu0 0
        %1137 = vmatpush1.bf16.xpose.msra.mxu0 0
        %1138 = vmatprep.subr.bf16.mxu0 0
        %1139 = vmatpush1.bf16.xpose.msra.mxu0 0
        %1140 = vmatprep.subr.bf16.mxu0 0
        %1141 = vmatpush1.bf16.xpose.msra.mxu0 0
        %1142 = vmatprep.mubr.bf16.mxu0 0
        %1143 = vmatmul.mubr.bf16.gmra.mrb[0].mxu0 %v1105
        %v1144 = vpop.f32.mrb[0].mxu0
        %v1145 = vadd.f32 %v871, %v1144
        %v1146 = vpop.f32.mrb[0].mxu0
        %v1147 = vpop.f32.mrb[0].mxu0
        %v1148 = vpop.f32.mrb[0].mxu0
        %1149 = vdwg.mxu0
        %v1150 = vsel %vm920, %v1145, -inf
        %1151 = vmax.xlane.f32.xlu0 %v1150
        %v1152 = vpop.xlane.xlu0 %1151
        %v1153 = vsub.f32 %v1145, %v1152
        %v1154 = vmul.f32 %v1153, 1.442695
        %v1155 = vpow.pop %v1154
        %v1156 = vsel %vm920, %v1155, 0.0
        %1157 = vadd.xlane.f32.xlu0 %v1156
        %v1158 = vpop.xlane.xlu0 %1157
        %v1159 = vrcp.pop %v1158
        %v1160 = vmul.f32 %v1155, %v1159
        %v1161 = vpack.c.bf16 %v1160, %v1160
        %1162 = vrot.lane.b32.xlu0 %v865, 96
        %v1163 = vpop.permute.xlu0 %1162
        %v1165 = vsel %vm920, %v1161, 0
        %v1168 = vsel %vm936, %v1163, 0
        %1170 = vmatprep.subr.bf16.mxu0 0
        %1171 = vmatpush1.bf16.msra.mxu0 %v1168
        %1172 = vmatprep.subr.bf16.mxu0 0
        %1173 = vmatpush1.bf16.msra.mxu0 0
        %1174 = vmatprep.subr.bf16.mxu0 0
        %1175 = vmatpush1.bf16.msra.mxu0 0
        %1176 = vmatprep.subr.bf16.mxu0 0
        %1177 = vmatpush1.bf16.msra.mxu0 0
        %1178 = vmatprep.subr.bf16.mxu0 0
        %1179 = vmatpush1.bf16.msra.mxu0 0
        %1180 = vmatprep.subr.bf16.mxu0 0
        %1181 = vmatpush1.bf16.msra.mxu0 0
        %1182 = vmatprep.subr.bf16.mxu0 0
        %1183 = vmatpush1.bf16.msra.mxu0 0
        %1184 = vmatprep.subr.bf16.mxu0 0
        %1185 = vmatpush1.bf16.msra.mxu0 0
        %1186 = vmatprep.subr.bf16.mxu0 0
        %1187 = vmatpush1.bf16.msra.mxu0 0
        %1188 = vmatprep.subr.bf16.mxu0 0
        %1189 = vmatpush1.bf16.msra.mxu0 0
        %1190 = vmatprep.subr.bf16.mxu0 0
        %1191 = vmatpush1.bf16.msra.mxu0 0
        %1192 = vmatprep.subr.bf16.mxu0 0
        %1193 = vmatpush1.bf16.msra.mxu0 0
        %1194 = vmatprep.subr.bf16.mxu0 0
        %1195 = vmatpush1.bf16.msra.mxu0 0
        %1196 = vmatprep.subr.bf16.mxu0 0
        %1197 = vmatpush1.bf16.msra.mxu0 0
        %1198 = vmatprep.subr.bf16.mxu0 0
        %1199 = vmatpush1.bf16.msra.mxu0 0
        %1200 = vmatprep.subr.bf16.mxu0 0
        %1201 = vmatpush1.bf16.msra.mxu0 0
        %1202 = vmatprep.mubr.bf16.mxu0 0
        %1203 = vmatmul.mubr.bf16.gmra.mrb[0].mxu0 %v1165
        %v1204 = vpop.f32.mrb[0].mxu0
        %v1205 = vadd.f32 0.0, %v1204
        %v1206 = vpop.f32.mrb[0].mxu0
        %v1207 = vpop.f32.mrb[0].mxu0
        %v1208 = vpop.f32.mrb[0].mxu0
        %1209 = vdwg.mxu0
        %1211 = vrot.lane.b32.xlu0 %v1205, 32
        %v1212 = vpop.permute.xlu0 %1211
        %vm1214 = vcmask 392448
        %1215 = vst.msk [vmem:[#allocation2] sm:$0xff] %vm1214, %v1212
        %1216 = vrot.lane.b32.xlu0 %v727, 80
        %v1217 = vpop.permute.xlu0 %1216
        %1218 = vrot.lane.b32.xlu0 %v796, 80
        %v1219 = vpop.permute.xlu0 %1218
        %v1221 = vsel %vm873, %v1217, 0
        %v1224 = vsel %vm873, %v1219, 0
        %1226 = vmatprep.subr.bf16.mxu0 0
        %1227 = vmatpush1.bf16.xpose.msra.mxu0 %v1224
        %1228 = vmatprep.subr.bf16.mxu0 0
        %1229 = vmatpush1.bf16.xpose.msra.mxu0 0
        %1230 = vmatprep.subr.bf16.mxu0 0
        %1231 = vmatpush1.bf16.xpose.msra.mxu0 0
        %1232 = vmatprep.subr.bf16.mxu0 0
        %1233 = vmatpush1.bf16.xpose.msra.mxu0 0
        %1234 = vmatprep.subr.bf16.mxu0 0
        %1235 = vmatpush1.bf16.xpose.msra.mxu0 0
        %1236 = vmatprep.subr.bf16.mxu0 0
        %1237 = vmatpush1.bf16.xpose.msra.mxu0 0
        %1238 = vmatprep.subr.bf16.mxu0 0
        %1239 = vmatpush1.bf16.xpose.msra.mxu0 0
        %1240 = vmatprep.subr.bf16.mxu0 0
        %1241 = vmatpush1.bf16.xpose.msra.mxu0 0
        %1242 = vmatprep.subr.bf16.mxu0 0
        %1243 = vmatpush1.bf16.xpose.msra.mxu0 0
        %1244 = vmatprep.subr.bf16.mxu0 0
        %1245 = vmatpush1.bf16.xpose.msra.mxu0 0
        %1246 = vmatprep.subr.bf16.mxu0 0
        %1247 = vmatpush1.bf16.xpose.msra.mxu0 0
        %1248 = vmatprep.subr.bf16.mxu0 0
        %1249 = vmatpush1.bf16.xpose.msra.mxu0 0
        %1250 = vmatprep.subr.bf16.mxu0 0
        %1251 = vmatpush1.bf16.xpose.msra.mxu0 0
        %1252 = vmatprep.subr.bf16.mxu0 0
        %1253 = vmatpush1.bf16.xpose.msra.mxu0 0
        %1254 = vmatprep.subr.bf16.mxu0 0
        %1255 = vmatpush1.bf16.xpose.msra.mxu0 0
        %1256 = vmatprep.subr.bf16.mxu0 0
        %1257 = vmatpush1.bf16.xpose.msra.mxu0 0
        %1258 = vmatprep.mubr.bf16.mxu0 0
        %1259 = vmatmul.mubr.bf16.gmra.mrb[0].mxu0 %v1221
        %v1260 = vpop.f32.mrb[0].mxu0
        %v1261 = vadd.f32 %v871, %v1260
        %v1262 = vpop.f32.mrb[0].mxu0
        %v1263 = vpop.f32.mrb[0].mxu0
        %v1264 = vpop.f32.mrb[0].mxu0
        %1265 = vdwg.mxu0
        %v1266 = vsel %vm920, %v1261, -inf
        %1267 = vmax.xlane.f32.xlu0 %v1266
        %v1268 = vpop.xlane.xlu0 %1267
        %v1269 = vsub.f32 %v1261, %v1268
        %v1270 = vmul.f32 %v1269, 1.442695
        %v1271 = vpow.pop %v1270
        %v1272 = vsel %vm920, %v1271, 0.0
        %1273 = vadd.xlane.f32.xlu0 %v1272
        %v1274 = vpop.xlane.xlu0 %1273
        %v1275 = vrcp.pop %v1274
        %v1276 = vmul.f32 %v1271, %v1275
        %v1277 = vpack.c.bf16 %v1276, %v1276
        %1278 = vrot.lane.b32.xlu0 %v865, 80
        %v1279 = vpop.permute.xlu0 %1278
        %v1281 = vsel %vm920, %v1277, 0
        %v1284 = vsel %vm936, %v1279, 0
        %1286 = vmatprep.subr.bf16.mxu0 0
        %1287 = vmatpush1.bf16.msra.mxu0 %v1284
        %1288 = vmatprep.subr.bf16.mxu0 0
        %1289 = vmatpush1.bf16.msra.mxu0 0
        %1290 = vmatprep.subr.bf16.mxu0 0
        %1291 = vmatpush1.bf16.msra.mxu0 0
        %1292 = vmatprep.subr.bf16.mxu0 0
        %1293 = vmatpush1.bf16.msra.mxu0 0
        %1294 = vmatprep.subr.bf16.mxu0 0
        %1295 = vmatpush1.bf16.msra.mxu0 0
        %1296 = vmatprep.subr.bf16.mxu0 0
        %1297 = vmatpush1.bf16.msra.mxu0 0
        %1298 = vmatprep.subr.bf16.mxu0 0
        %1299 = vmatpush1.bf16.msra.mxu0 0
        %1300 = vmatprep.subr.bf16.mxu0 0
        %1301 = vmatpush1.bf16.msra.mxu0 0
        %1302 = vmatprep.subr.bf16.mxu0 0
        %1303 = vmatpush1.bf16.msra.mxu0 0
        %1304 = vmatprep.subr.bf16.mxu0 0
        %1305 = vmatpush1.bf16.msra.mxu0 0
        %1306 = vmatprep.subr.bf16.mxu0 0
        %1307 = vmatpush1.bf16.msra.mxu0 0
        %1308 = vmatprep.subr.bf16.mxu0 0
        %1309 = vmatpush1.bf16.msra.mxu0 0
        %1310 = vmatprep.subr.bf16.mxu0 0
        %1311 = vmatpush1.bf16.msra.mxu0 0
        %1312 = vmatprep.subr.bf16.mxu0 0
        %1313 = vmatpush1.bf16.msra.mxu0 0
        %1314 = vmatprep.subr.bf16.mxu0 0
        %1315 = vmatpush1.bf16.msra.mxu0 0
        %1316 = vmatprep.subr.bf16.mxu0 0
        %1317 = vmatpush1.bf16.msra.mxu0 0
        %1318 = vmatprep.mubr.bf16.mxu0 0
        %1319 = vmatmul.mubr.bf16.gmra.mrb[0].mxu0 %v1281
        %v1320 = vpop.f32.mrb[0].mxu0
        %v1321 = vadd.f32 0.0, %v1320
        %v1322 = vpop.f32.mrb[0].mxu0
        %v1323 = vpop.f32.mrb[0].mxu0
        %v1324 = vpop.f32.mrb[0].mxu0
        %1325 = vdwg.mxu0
        %1327 = vrot.lane.b32.xlu0 %v1321, 48
        %v1328 = vpop.permute.xlu0 %1327
        %vm1330 = vcmask 523648
        %1331 = vst.msk [vmem:[#allocation2] sm:$0xff] %vm1330, %v1328
        %v1332 = vld [vmem:[#allocation2] sm:$0xff]
        %v1333 = vpack.c.bf16 %v1332, %v1332
        %v1334 = vld [vmem:[%s11] sm:$0xf]
        %v1335 = vld [vmem:[%s11 + $0x4] sm:$0xf]
        %v1336 = vld [vmem:[%s11 + $0x8] sm:$0xf]
        %v1337 = vld [vmem:[%s11 + $0xc] sm:$0xf]
        %v1338 = vld [vmem:[%s11 + $0x10] sm:$0xf]
        %v1339 = vld [vmem:[%s11 + $0x14] sm:$0xf]
        %v1340 = vld [vmem:[%s11 + $0x18] sm:$0xf]
        %v1341 = vld [vmem:[%s11 + $0x1c] sm:$0xf]
        %v1342 = vld [vmem:[%s12] sm:$0x1]
        %v1344 = vlaneseq
        %v1345 = vshrl.u32 %v1344, 7
        %v1346 = vsub.s32 0, %v1345
        %v1347 = vrot.slane %v1342, %v1346
        %v1357 = vunpack.c.l.b16 %v1334
        %v1358 = vunpack.c.l.b16 %v1335
        %v1359 = vunpack.c.l.b16 %v1336
        %v1360 = vunpack.c.l.b16 %v1337
        %v1361 = vunpack.c.l.b16 %v1338
        %v1362 = vunpack.c.l.b16 %v1339
        %v1363 = vunpack.c.l.b16 %v1340
        %v1364 = vunpack.c.l.b16 %v1341
        %v1365 = vpack.c.b16 %v1358, %v1357
        %v1366 = vpack.c.b16 %v1360, %v1359
        %v1367 = vpack.c.b16 %v1362, %v1361
        %v1368 = vpack.c.b16 %v1364, %v1363
        %vm1373 = vcmask 523264
        %v1375 = vsel %vm1373, %v1333, 0
        %1377 = vmatprep.subr.bf16.mxu0 0
        %1378 = vmatpush1.bf16.msra.mxu0 %v1365
        %1379 = vmatprep.subr.bf16.mxu0 0
        %1380 = vmatpush1.bf16.msra.mxu0 %v1366
        %1381 = vmatprep.subr.bf16.mxu0 0
        %1382 = vmatpush1.bf16.msra.mxu0 %v1367
        %1383 = vmatprep.subr.bf16.mxu0 0
        %1384 = vmatpush1.bf16.msra.mxu0 %v1368
        %1385 = vmatprep.subr.bf16.mxu0 0
        %1386 = vmatpush1.bf16.msra.mxu0 0
        %1387 = vmatprep.subr.bf16.mxu0 0
        %1388 = vmatpush1.bf16.msra.mxu0 0
        %1389 = vmatprep.subr.bf16.mxu0 0
        %1390 = vmatpush1.bf16.msra.mxu0 0
        %1391 = vmatprep.subr.bf16.mxu0 0
        %1392 = vmatpush1.bf16.msra.mxu0 0
        %1393 = vmatprep.subr.bf16.mxu0 0
        %1394 = vmatpush1.bf16.msra.mxu0 0
        %1395 = vmatprep.subr.bf16.mxu0 0
        %1396 = vmatpush1.bf16.msra.mxu0 0
        %1397 = vmatprep.subr.bf16.mxu0 0
        %1398 = vmatpush1.bf16.msra.mxu0 0
        %1399 = vmatprep.subr.bf16.mxu0 0
        %1400 = vmatpush1.bf16.msra.mxu0 0
        %1401 = vmatprep.subr.bf16.mxu0 0
        %1402 = vmatpush1.bf16.msra.mxu0 0
        %1403 = vmatprep.subr.bf16.mxu0 0
        %1404 = vmatpush1.bf16.msra.mxu0 0
        %1405 = vmatprep.subr.bf16.mxu0 0
        %1406 = vmatpush1.bf16.msra.mxu0 0
        %1407 = vmatprep.subr.bf16.mxu0 0
        %1408 = vmatpush1.bf16.msra.mxu0 0
        %1409 = vmatprep.mubr.bf16.mxu0 0
        %1410 = vmatmul.mubr.bf16.gmra.mrb[0].mxu0 %v1375
        %v1411 = vpop.f32.mrb[0].mxu0
        %v1412 = vadd.f32 %v1347, %v1411
        %v1413 = vpop.f32.mrb[0].mxu0
        %v1414 = vpop.f32.mrb[0].mxu0
        %v1415 = vpop.f32.mrb[0].mxu0
        %1416 = vdwg.mxu0
        %v1417 = vld [vmem:[%s558] sm:$0xff]
        %v1418 = vadd.f32 %v1412, %v1417
        %v1419 = vsel %vm683, %v1418, 0.0
        %1420 = vadd.xlane.f32.xlu0 %v1419
        %v1421 = vpop.xlane.xlu0 %1420
        %v1422 = vrcp.pop 32.0
        %v1423 = vmul.f32 %v1421, %v1422
        %v1424 = vsub.f32 %v1418, %v1423
        %v1425 = vmul.f32 %v1424, %v1424
        %v1426 = vsel %vm683, %v1425, 0.0
        %1427 = vadd.xlane.f32.xlu0 %v1426
        %v1428 = vpop.xlane.xlu0 %1427
        %v1429 = vmul.f32 %v1428, %v1422
        %v1430 = vadd.f32 %v1429, 1e-05
        %v1431 = vrsqrt.pop %v1430
        %v1432 = vmul.f32 %v1424, %v1431
        %v1433 = vld [vmem:[%s13] sm:$0x1]
        %v1435 = vlaneseq
        %v1436 = vshrl.u32 %v1435, 7
        %v1437 = vsub.s32 0, %v1436
        %v1438 = vrot.slane %v1433, %v1437
        %v1440 = vmul.f32 %v1432, %v1438
        %v1441 = vld [vmem:[%s14] sm:$0x1]
        %v1443 = vlaneseq
        %v1444 = vshrl.u32 %v1443, 7
        %v1445 = vsub.s32 0, %v1444
        %v1446 = vrot.slane %v1441, %v1445
        %v1448 = vadd.f32 %v1440, %v1446
        %1449 = vst.msk [vmem:[%s638] sm:$0xff] %vm683, %v1448
        %s1450 = sand.u32 %s400, 1
        %s1451 = scalar_lea.sflag [#allocation5], %s1450
        %s1452 = sand.u32 %s400, 1
        %s1453 = smul.addr %s1452, 8
        %s1454 = scalar_lea.vmem [#allocation12], %s1453
        // Predicated region
        $region101: #{tpu_custom_call.1} parent=79 // pred_check
          %p1455 = pneg %p410
        $region102: #{tpu_custom_call.1} parent=79 // pred_check_branch
          %1457 = sbr.rel (%p1455) target = $region104
        $region103: #{tpu_custom_call.1} parent=79 // pred_region
          %s1459 = ssub.s32 128, 128
          %1460 = vsyncadd %s1451, %s1459
          %s1461 = sadd.s32 %s39, %s38
          %s1462 = smul.addr %s1461, 128
          %s1463 = scalar_lea.hbm %s15, %s1462
          %s1465 = sshll.u32 %s1454, 4
          %s1466 = int_to_ptr.vmem [resolvable:$true] %s1465
          %1468 = dma.vmem_to_hbm [thread:$0]  %s1466, 128, %s1463, %s1451
        $region104: #{tpu_custom_call.1} parent=79 // pred_fallthru
          _
      $region80: #{tpu_custom_call.1} parent=5 // pred_fallthru
        _
      %p1469 = scmp.le.s32.totalorder 2, %s29
      // Predicated region
      $region105: #{tpu_custom_call.1} parent=5 // pred_check
        %p1470 = pneg %p1469
      $region106: #{tpu_custom_call.1} parent=5 // pred_check_branch
        %1472 = sbr.rel (%p1470) target = $region108
      $region107: #{tpu_custom_call.1} parent=5 // pred_region
        %s1473 = ssub.s32 %s29, 2
        // Predicated region
        $region109: #{tpu_custom_call.1} parent=107 // pred_check
          %p1474 = pneg %p416
        $region110: #{tpu_custom_call.1} parent=107 // pred_check_branch
          %1476 = sbr.rel (%p1474) target = $region112
        $region111: #{tpu_custom_call.1} parent=107 // pred_region
          %s1477 = sand.u32 %s401, 1
          %s1478 = scalar_lea.sflag [#allocation5], %s1477
          %s1479 = sand.u32 %s401, 1
          %s1480 = smul.addr %s1479, 8
          %s1481 = scalar_lea.vmem [#allocation12], %s1480
          %1482 = dma.done %s1478, 128
        $region112: #{tpu_custom_call.1} parent=107 // pred_fallthru
          _
      $region108: #{tpu_custom_call.1} parent=5 // pred_fallthru
        _
    $region6: #{tpu_custom_call.1} parent=1 // loop_footer
      %s33 = sadd.s32 1, %s29
    $region7: #{tpu_custom_call.1} parent=1 // loop_footer_branch
      %28 = sbr.rel target = $region3
    $region8: #{tpu_custom_call.1} parent=1 // loop_exit
      _
    %1483 = vsyncpa [#allocation4], 1
    %s1484 = scalar_lea.sflag [#allocation4], 1
    %1485 = vsyncpa %s1484, 1
    %1486 = vsyncpa [#allocation7], 1
    %1487 = vsyncpa [#allocation10], 1
    %1488 = vsyncpa [#allocation5], 1
    %s1489 = scalar_lea.sflag [#allocation5], 1
    %1490 = vsyncpa %s1489, 1

</llo_original>
